<compile_context>
chip_gen: v7x
topology: tpu7x:2x2x1
jax: 0.10.0
libtpu: 0.0.40
codegen_flags: <defaults>
</compile_context>

<pallas_src>
import functools
import math

import jax
import jax.numpy as jnp
from jax import lax
from jax.experimental import pallas as pl
from jax.experimental.pallas import tpu as pltpu


def _mha_kernel(q_ref, k_ref, v_ref,
                wq_ref, bq_ref, wk_ref, bk_ref, wv_ref, bv_ref,
                wo_ref, bo_ref,
                o_ref, *, h, d_k):
    """One grid step == (batch element, query tile).

    q_ref:  (1, TQ, D) f32   query activations for this tile
    k_ref:  (1, S,  D) f32   full key activations for this batch element
    v_ref:  (1, S,  D) f32   full value activations
    w*_ref: (D, D)    bf16   projection weights (x @ W layout)
    b*_ref: (1, D)    f32    projection biases
    o_ref:  (1, TQ, D)       output tile
    """
    tq = q_ref.shape[1]
    d = q_ref.shape[2]
    f32 = jnp.float32
    bf16 = jnp.bfloat16

    # ---- QKV projections: bf16 MXU matmuls, f32 accumulation, bias add in f32. ----
    xq = q_ref[0].astype(bf16)          # (TQ, D)
    xk = k_ref[0].astype(bf16)          # (S,  D)
    xv = v_ref[0].astype(bf16)          # (S,  D)

    # Fold 1/sqrt(d_k) into q once (TQ*D mults) instead of scaling every (TQ, S)
    # score matrix per head (h*TQ*S mults).
    scale = 1.0 / math.sqrt(d_k)
    q = (jnp.dot(xq, wq_ref[...], preferred_element_type=f32) + bq_ref[...]) * scale
    k = jnp.dot(xk, wk_ref[...], preferred_element_type=f32) + bk_ref[...]
    v = jnp.dot(xv, wv_ref[...], preferred_element_type=f32) + bv_ref[...]

    q = q.astype(bf16)                  # (TQ, D)
    k = k.astype(bf16)                  # (S,  D)
    v = v.astype(bf16)                  # (S,  D)

    # ---- Per-head attention, accumulated straight into the output projection. ----
    # TODO(synk): for v6e MXU occupancy, 2-4 heads could be packed per MXU pass;
    # kept one-head-per-pass for clarity (projections remain the dominant matmuls).
    out_acc = jnp.zeros((tq, d), f32)
    for i in range(h):                  # h is small and static -> fully unrolled
        sl = slice(i * d_k, (i + 1) * d_k)
        qh = q[:, sl]                   # (TQ, d_k)
        kh = k[:, sl]                   # (S,  d_k)
        vh = v[:, sl]                   # (S,  d_k)

        # q @ k^T without materializing a transpose: contract the last dims.
        s = lax.dot_general(qh, kh, (((1,), (1,)), ((), ())),
                            preferred_element_type=f32)          # (TQ, S)

        # Numerically-stable softmax; divide via EUP approx reciprocal.
        s = s - jnp.max(s, axis=-1, keepdims=True)
        p = jnp.exp(s)
        p = p * pl.reciprocal(jnp.sum(p, axis=-1, keepdims=True), approx=True)

        ho = jnp.dot(p.astype(bf16), vh, preferred_element_type=f32)   # (TQ, d_k)
        # Fused output projection: accumulate head_i @ Wo[rows of head_i] into the
        # full-width accumulator -> no lane-narrow concat, lane-dense final store.
        out_acc = out_acc + jnp.dot(ho.astype(bf16), wo_ref[sl, :],
                                    preferred_element_type=f32)

    o_ref[0] = (out_acc + bo_ref[...]).astype(o_ref.dtype)


def multi_head_attention(Q, K, V, params, *, h, block_q=256):
    """Q, K, V: (B, S, D) f32. params: weights (D, D) and biases (1, D), f32."""
    B, S, D = Q.shape
    assert D % h == 0
    d_k = D // h

    # Query-tile size: divisible by 8 (sublane) or the full seq length.
    tq = min(block_q, S)
    if S % tq != 0:
        tq = S
    n_q = S // tq

    bf16 = jnp.bfloat16
    wq = params["wq"].astype(bf16)
    wk = params["wk"].astype(bf16)
    wv = params["wv"].astype(bf16)
    wo = params["wo"].astype(bf16)
    # TODO(synk): when Q is K is V (self-attention) the three projections could be
    # fused into one (D, 3D) matmul; not done since the call site passes distinct
    # Q/K/V tensors.

    q_spec = pl.BlockSpec((1, tq, D), lambda b, qi: (b, qi, 0))
    kv_spec = pl.BlockSpec((1, S, D), lambda b, qi: (b, 0, 0))
    w_spec = pl.BlockSpec((D, D), lambda b, qi: (0, 0))
    b_spec = pl.BlockSpec((1, D), lambda b, qi: (0, 0))

    kernel = functools.partial(_mha_kernel, h=h, d_k=d_k)

    return pl.pallas_call(
        kernel,
        out_shape=jax.ShapeDtypeStruct((B, S, D), Q.dtype),
        grid_spec=pltpu.PrefetchScalarGridSpec(
            num_scalar_prefetch=0,
            grid=(B, n_q),
            in_specs=[q_spec, kv_spec, kv_spec,
                      w_spec, b_spec,   # q_fc
                      w_spec, b_spec,   # k_fc
                      w_spec, b_spec,   # v_fc
                      w_spec, b_spec],  # out_fc
            out_specs=q_spec,
        ),
        compiler_params=pltpu.CompilerParams(
            dimension_semantics=("parallel", "parallel")),
    )(Q, K, V,
      wq, params["bq"],
      wk, params["bk"],
      wv, params["bv"],
      wo, params["bo"])


def _reference(Q, K, V, params, *, h):
    """Pure-JAX f32 reference of the intended torch forward pass."""
    B, S, D = Q.shape
    d_k = D // h

    def lin(x, w, b):
        return x @ w + b

    def split_heads(x):                                    # (B, S, D) -> (B, h, S, d_k)
        return x.reshape(B, S, h, d_k).transpose(0, 2, 1, 3)

    q = split_heads(lin(Q, params["wq"], params["bq"]))
    k = split_heads(lin(K, params["wk"], params["bk"]))
    v = split_heads(lin(V, params["wv"], params["bv"]))

    s = jnp.einsum("bhqd,bhkd->bhqk", q, k) / math.sqrt(d_k)
    p = jax.nn.softmax(s, axis=-1)
    o = jnp.einsum("bhqk,bhkd->bhqd", p, v)
    o = o.transpose(0, 2, 1, 3).reshape(B, S, D)
    return lin(o, params["wo"], params["bo"])


if __name__ == "__main__":
    B, S, d_model, h = 2, 8, 32, 4

    key = jax.random.PRNGKey(0)
    ks = jax.random.split(key, 11)

    def w_init(k):
        return (jax.random.normal(k, (d_model, d_model), jnp.float32)
                / math.sqrt(d_model))

    def b_init(k):
        return jax.random.normal(k, (1, d_model), jnp.float32) * 0.01

    params = {
        "wq": w_init(ks[0]), "bq": b_init(ks[1]),
        "wk": w_init(ks[2]), "bk": b_init(ks[3]),
        "wv": w_init(ks[4]), "bv": b_init(ks[5]),
        "wo": w_init(ks[6]), "bo": b_init(ks[7]),
    }

    Q = jax.random.normal(ks[8], (B, S, d_model), jnp.float32)
    K = jax.random.normal(ks[9], (B, S, d_model), jnp.float32)
    V = jax.random.normal(ks[10], (B, S, d_model), jnp.float32)

    out = multi_head_attention(Q, K, V, params, h=h)
    out = jax.block_until_ready(out)

    ref = _reference(Q, K, V, params, h=h)
    assert out.shape == (B, S, d_model)
    # Tolerance relaxed vs. a pure-f32 check: the kernel runs all matmuls with
    # bf16 operands (f32 accumulation) and uses an approx reciprocal in softmax.
    assert jnp.allclose(out, ref, atol=5e-2, rtol=5e-2), "mismatch vs reference"

    print("KERNEL_OK")
</pallas_src>

<mosaic_0001>
module attributes {stable_mosaic.version = 11 : i64} {
  func.func @_mha_kernel(%arg0: i32, %arg1: i32, %arg2: memref<1x8x32xf32, #tpu.memory_space<vmem>>, %arg3: memref<1x8x32xf32, #tpu.memory_space<vmem>>, %arg4: memref<1x8x32xf32, #tpu.memory_space<vmem>>, %arg5: memref<32x32xbf16, #tpu.memory_space<vmem>>, %arg6: memref<1x32xf32, #tpu.memory_space<vmem>>, %arg7: memref<32x32xbf16, #tpu.memory_space<vmem>>, %arg8: memref<1x32xf32, #tpu.memory_space<vmem>>, %arg9: memref<32x32xbf16, #tpu.memory_space<vmem>>, %arg10: memref<1x32xf32, #tpu.memory_space<vmem>>, %arg11: memref<32x32xbf16, #tpu.memory_space<vmem>>, %arg12: memref<1x32xf32, #tpu.memory_space<vmem>>, %arg13: memref<1x8x32xf32, #tpu.memory_space<vmem>>) attributes {dimension_semantics = [#tpu.dimension_semantics<parallel>, #tpu.dimension_semantics<parallel>], iteration_bounds = array<i64: 2, 1>, scalar_prefetch = 0 : i64, scratch_operands = 0 : i64, tpu.core_type = #tpu.core_type<tc>, window_params = [{transform_indices = @transform_0, window_bounds = array<i64: 1, 8, 32>}, {transform_indices = @transform_1, window_bounds = array<i64: 1, 8, 32>}, {transform_indices = @transform_2, window_bounds = array<i64: 1, 8, 32>}, {pipeline_mode = #tpu.pipeline_mode<synchronous>, transform_indices = @transform_3, window_bounds = array<i64: 32, 32>}, {pipeline_mode = #tpu.pipeline_mode<synchronous>, transform_indices = @transform_4, window_bounds = array<i64: 1, 32>}, {pipeline_mode = #tpu.pipeline_mode<synchronous>, transform_indices = @transform_5, window_bounds = array<i64: 32, 32>}, {pipeline_mode = #tpu.pipeline_mode<synchronous>, transform_indices = @transform_6, window_bounds = array<i64: 1, 32>}, {pipeline_mode = #tpu.pipeline_mode<synchronous>, transform_indices = @transform_7, window_bounds = array<i64: 32, 32>}, {pipeline_mode = #tpu.pipeline_mode<synchronous>, transform_indices = @transform_8, window_bounds = array<i64: 1, 32>}, {pipeline_mode = #tpu.pipeline_mode<synchronous>, transform_indices = @transform_9, window_bounds = array<i64: 32, 32>}, {pipeline_mode = #tpu.pipeline_mode<synchronous>, transform_indices = @transform_10, window_bounds = array<i64: 1, 32>}, {transform_indices = @transform_11, window_bounds = array<i64: 1, 8, 32>}]} {
    %c0 = arith.constant 0 : index
    %c0_0 = arith.constant 0 : index
    %c0_1 = arith.constant 0 : index
    %0 = vector.load %arg2[%c0, %c0_0, %c0_1] : memref<1x8x32xf32, #tpu.memory_space<vmem>>, vector<1x8x32xf32>
    %1 = vector.shape_cast %0 : vector<1x8x32xf32> to vector<8x32xf32>
    %2 = arith.truncf %1 : vector<8x32xf32> to vector<8x32xbf16>
    %c0_2 = arith.constant 0 : index
    %c0_3 = arith.constant 0 : index
    %c0_4 = arith.constant 0 : index
    %3 = vector.load %arg3[%c0_2, %c0_3, %c0_4] : memref<1x8x32xf32, #tpu.memory_space<vmem>>, vector<1x8x32xf32>
    %4 = vector.shape_cast %3 : vector<1x8x32xf32> to vector<8x32xf32>
    %5 = arith.truncf %4 : vector<8x32xf32> to vector<8x32xbf16>
    %c0_5 = arith.constant 0 : index
    %c0_6 = arith.constant 0 : index
    %c0_7 = arith.constant 0 : index
    %6 = vector.load %arg4[%c0_5, %c0_6, %c0_7] : memref<1x8x32xf32, #tpu.memory_space<vmem>>, vector<1x8x32xf32>
    %7 = vector.shape_cast %6 : vector<1x8x32xf32> to vector<8x32xf32>
    %8 = arith.truncf %7 : vector<8x32xf32> to vector<8x32xbf16>
    %c0_8 = arith.constant 0 : index
    %c0_9 = arith.constant 0 : index
    %9 = vector.load %arg5[%c0_8, %c0_9] : memref<32x32xbf16, #tpu.memory_space<vmem>>, vector<32x32xbf16>
    %cst = arith.constant dense<0.000000e+00> : vector<8x32xf32>
    %10 = tpu.matmul %2, %9, %cst {dimension_numbers = #tpu.dot_dimension_numbers<[1], [0], [0], [1], [0, 0, 1, 1], [], []>} : vector<8x32xbf16>, vector<32x32xbf16>, vector<8x32xf32> -> vector<8x32xf32>
    %c0_10 = arith.constant 0 : index
    %c0_11 = arith.constant 0 : index
    %11 = vector.load %arg6[%c0_10, %c0_11] : memref<1x32xf32, #tpu.memory_space<vmem>>, vector<1x32xf32>
    %12 = vector.broadcast %11 : vector<1x32xf32> to vector<8x32xf32>
    %13 = arith.addf %10, %12 : vector<8x32xf32>
    %cst_12 = arith.constant 0.353553385 : f32
    %14 = vector.broadcast %cst_12 : f32 to vector<8x32xf32>
    %15 = arith.mulf %13, %14 : vector<8x32xf32>
    %c0_13 = arith.constant 0 : index
    %c0_14 = arith.constant 0 : index
    %16 = vector.load %arg7[%c0_13, %c0_14] : memref<32x32xbf16, #tpu.memory_space<vmem>>, vector<32x32xbf16>
    %cst_15 = arith.constant dense<0.000000e+00> : vector<8x32xf32>
    %17 = tpu.matmul %5, %16, %cst_15 {dimension_numbers = #tpu.dot_dimension_numbers<[1], [0], [0], [1], [0, 0, 1, 1], [], []>} : vector<8x32xbf16>, vector<32x32xbf16>, vector<8x32xf32> -> vector<8x32xf32>
    %c0_16 = arith.constant 0 : index
    %c0_17 = arith.constant 0 : index
    %18 = vector.load %arg8[%c0_16, %c0_17] : memref<1x32xf32, #tpu.memory_space<vmem>>, vector<1x32xf32>
    %19 = vector.broadcast %18 : vector<1x32xf32> to vector<8x32xf32>
    %20 = arith.addf %17, %19 : vector<8x32xf32>
    %c0_18 = arith.constant 0 : index
    %c0_19 = arith.constant 0 : index
    %21 = vector.load %arg9[%c0_18, %c0_19] : memref<32x32xbf16, #tpu.memory_space<vmem>>, vector<32x32xbf16>
    %cst_20 = arith.constant dense<0.000000e+00> : vector<8x32xf32>
    %22 = tpu.matmul %8, %21, %cst_20 {dimension_numbers = #tpu.dot_dimension_numbers<[1], [0], [0], [1], [0, 0, 1, 1], [], []>} : vector<8x32xbf16>, vector<32x32xbf16>, vector<8x32xf32> -> vector<8x32xf32>
    %c0_21 = arith.constant 0 : index
    %c0_22 = arith.constant 0 : index
    %23 = vector.load %arg10[%c0_21, %c0_22] : memref<1x32xf32, #tpu.memory_space<vmem>>, vector<1x32xf32>
    %24 = vector.broadcast %23 : vector<1x32xf32> to vector<8x32xf32>
    %25 = arith.addf %22, %24 : vector<8x32xf32>
    %26 = arith.truncf %15 : vector<8x32xf32> to vector<8x32xbf16>
    %27 = arith.truncf %20 : vector<8x32xf32> to vector<8x32xbf16>
    %28 = arith.truncf %25 : vector<8x32xf32> to vector<8x32xbf16>
    %cst_23 = arith.constant 0.000000e+00 : f32
    %29 = vector.broadcast %cst_23 : f32 to vector<8x32xf32>
    %30 = vector.extract_strided_slice %26 {offsets = [0, 0], sizes = [8, 8], strides = [1, 1]} : vector<8x32xbf16> to vector<8x8xbf16>
    %31 = vector.extract_strided_slice %27 {offsets = [0, 0], sizes = [8, 8], strides = [1, 1]} : vector<8x32xbf16> to vector<8x8xbf16>
    %32 = vector.extract_strided_slice %28 {offsets = [0, 0], sizes = [8, 8], strides = [1, 1]} : vector<8x32xbf16> to vector<8x8xbf16>
    %cst_24 = arith.constant dense<0.000000e+00> : vector<8x8xf32>
    %33 = tpu.matmul %30, %31, %cst_24 {dimension_numbers = #tpu.dot_dimension_numbers<[1], [1], [0], [0], [0, 0, 1, 0], [], []>} : vector<8x8xbf16>, vector<8x8xbf16>, vector<8x8xf32> -> vector<8x8xf32>
    %cst_25 = arith.constant dense<0xFF800000> : vector<8xf32>
    %34 = vector.multi_reduction <maximumf>, %33, %cst_25 [1] : vector<8x8xf32> to vector<8xf32>
    %35 = vector.shape_cast %34 : vector<8xf32> to vector<8x1xf32>
    %36 = vector.broadcast %35 : vector<8x1xf32> to vector<8x8xf32>
    %37 = arith.subf %33, %36 : vector<8x8xf32>
    %38 = math.exp %37 : vector<8x8xf32>
    %cst_26 = arith.constant dense<0.000000e+00> : vector<8xf32>
    %39 = vector.multi_reduction <add>, %38, %cst_26 [1] : vector<8x8xf32> to vector<8xf32>
    %40 = vector.shape_cast %39 : vector<8xf32> to vector<8x1xf32>
    %41 = tpu.reciprocal %40 {approx = true} : vector<8x1xf32> -> vector<8x1xf32>
    %42 = vector.broadcast %41 : vector<8x1xf32> to vector<8x8xf32>
    %43 = arith.mulf %38, %42 : vector<8x8xf32>
    %44 = arith.truncf %43 : vector<8x8xf32> to vector<8x8xbf16>
    %cst_27 = arith.constant dense<0.000000e+00> : vector<8x8xf32>
    %45 = tpu.matmul %44, %32, %cst_27 {dimension_numbers = #tpu.dot_dimension_numbers<[1], [0], [0], [1], [0, 0, 1, 1], [], []>} : vector<8x8xbf16>, vector<8x8xbf16>, vector<8x8xf32> -> vector<8x8xf32>
    %46 = arith.truncf %45 : vector<8x8xf32> to vector<8x8xbf16>
    %c0_28 = arith.constant 0 : index
    %c0_29 = arith.constant 0 : index
    %47 = vector.load %arg11[%c0_28, %c0_29] : memref<32x32xbf16, #tpu.memory_space<vmem>>, vector<8x32xbf16>
    %cst_30 = arith.constant dense<0.000000e+00> : vector<8x32xf32>
    %48 = tpu.matmul %46, %47, %cst_30 {dimension_numbers = #tpu.dot_dimension_numbers<[1], [0], [0], [1], [0, 0, 1, 1], [], []>} : vector<8x8xbf16>, vector<8x32xbf16>, vector<8x32xf32> -> vector<8x32xf32>
    %49 = arith.addf %29, %48 : vector<8x32xf32>
    %50 = vector.extract_strided_slice %26 {offsets = [0, 8], sizes = [8, 8], strides = [1, 1]} : vector<8x32xbf16> to vector<8x8xbf16>
    %51 = vector.extract_strided_slice %27 {offsets = [0, 8], sizes = [8, 8], strides = [1, 1]} : vector<8x32xbf16> to vector<8x8xbf16>
    %52 = vector.extract_strided_slice %28 {offsets = [0, 8], sizes = [8, 8], strides = [1, 1]} : vector<8x32xbf16> to vector<8x8xbf16>
    %cst_31 = arith.constant dense<0.000000e+00> : vector<8x8xf32>
    %53 = tpu.matmul %50, %51, %cst_31 {dimension_numbers = #tpu.dot_dimension_numbers<[1], [1], [0], [0], [0, 0, 1, 0], [], []>} : vector<8x8xbf16>, vector<8x8xbf16>, vector<8x8xf32> -> vector<8x8xf32>
    %cst_32 = arith.constant dense<0xFF800000> : vector<8xf32>
    %54 = vector.multi_reduction <maximumf>, %53, %cst_32 [1] : vector<8x8xf32> to vector<8xf32>
    %55 = vector.shape_cast %54 : vector<8xf32> to vector<8x1xf32>
    %56 = vector.broadcast %55 : vector<8x1xf32> to vector<8x8xf32>
    %57 = arith.subf %53, %56 : vector<8x8xf32>
    %58 = math.exp %57 : vector<8x8xf32>
    %cst_33 = arith.constant dense<0.000000e+00> : vector<8xf32>
    %59 = vector.multi_reduction <add>, %58, %cst_33 [1] : vector<8x8xf32> to vector<8xf32>
    %60 = vector.shape_cast %59 : vector<8xf32> to vector<8x1xf32>
    %61 = tpu.reciprocal %60 {approx = true} : vector<8x1xf32> -> vector<8x1xf32>
    %62 = vector.broadcast %61 : vector<8x1xf32> to vector<8x8xf32>
    %63 = arith.mulf %58, %62 : vector<8x8xf32>
    %64 = arith.truncf %63 : vector<8x8xf32> to vector<8x8xbf16>
    %cst_34 = arith.constant dense<0.000000e+00> : vector<8x8xf32>
    %65 = tpu.matmul %64, %52, %cst_34 {dimension_numbers = #tpu.dot_dimension_numbers<[1], [0], [0], [1], [0, 0, 1, 1], [], []>} : vector<8x8xbf16>, vector<8x8xbf16>, vector<8x8xf32> -> vector<8x8xf32>
    %66 = arith.truncf %65 : vector<8x8xf32> to vector<8x8xbf16>
    %c8 = arith.constant 8 : index
    %c0_35 = arith.constant 0 : index
    %67 = vector.load %arg11[%c8, %c0_35] : memref<32x32xbf16, #tpu.memory_space<vmem>>, vector<8x32xbf16>
    %cst_36 = arith.constant dense<0.000000e+00> : vector<8x32xf32>
    %68 = tpu.matmul %66, %67, %cst_36 {dimension_numbers = #tpu.dot_dimension_numbers<[1], [0], [0], [1], [0, 0, 1, 1], [], []>} : vector<8x8xbf16>, vector<8x32xbf16>, vector<8x32xf32> -> vector<8x32xf32>
    %69 = arith.addf %49, %68 : vector<8x32xf32>
    %70 = vector.extract_strided_slice %26 {offsets = [0, 16], sizes = [8, 8], strides = [1, 1]} : vector<8x32xbf16> to vector<8x8xbf16>
    %71 = vector.extract_strided_slice %27 {offsets = [0, 16], sizes = [8, 8], strides = [1, 1]} : vector<8x32xbf16> to vector<8x8xbf16>
    %72 = vector.extract_strided_slice %28 {offsets = [0, 16], sizes = [8, 8], strides = [1, 1]} : vector<8x32xbf16> to vector<8x8xbf16>
    %cst_37 = arith.constant dense<0.000000e+00> : vector<8x8xf32>
    %73 = tpu.matmul %70, %71, %cst_37 {dimension_numbers = #tpu.dot_dimension_numbers<[1], [1], [0], [0], [0, 0, 1, 0], [], []>} : vector<8x8xbf16>, vector<8x8xbf16>, vector<8x8xf32> -> vector<8x8xf32>
    %cst_38 = arith.constant dense<0xFF800000> : vector<8xf32>
    %74 = vector.multi_reduction <maximumf>, %73, %cst_38 [1] : vector<8x8xf32> to vector<8xf32>
    %75 = vector.shape_cast %74 : vector<8xf32> to vector<8x1xf32>
    %76 = vector.broadcast %75 : vector<8x1xf32> to vector<8x8xf32>
    %77 = arith.subf %73, %76 : vector<8x8xf32>
    %78 = math.exp %77 : vector<8x8xf32>
    %cst_39 = arith.constant dense<0.000000e+00> : vector<8xf32>
    %79 = vector.multi_reduction <add>, %78, %cst_39 [1] : vector<8x8xf32> to vector<8xf32>
    %80 = vector.shape_cast %79 : vector<8xf32> to vector<8x1xf32>
    %81 = tpu.reciprocal %80 {approx = true} : vector<8x1xf32> -> vector<8x1xf32>
    %82 = vector.broadcast %81 : vector<8x1xf32> to vector<8x8xf32>
    %83 = arith.mulf %78, %82 : vector<8x8xf32>
    %84 = arith.truncf %83 : vector<8x8xf32> to vector<8x8xbf16>
    %cst_40 = arith.constant dense<0.000000e+00> : vector<8x8xf32>
    %85 = tpu.matmul %84, %72, %cst_40 {dimension_numbers = #tpu.dot_dimension_numbers<[1], [0], [0], [1], [0, 0, 1, 1], [], []>} : vector<8x8xbf16>, vector<8x8xbf16>, vector<8x8xf32> -> vector<8x8xf32>
    %86 = arith.truncf %85 : vector<8x8xf32> to vector<8x8xbf16>
    %c16 = arith.constant 16 : index
    %c0_41 = arith.constant 0 : index
    %87 = vector.load %arg11[%c16, %c0_41] : memref<32x32xbf16, #tpu.memory_space<vmem>>, vector<8x32xbf16>
    %cst_42 = arith.constant dense<0.000000e+00> : vector<8x32xf32>
    %88 = tpu.matmul %86, %87, %cst_42 {dimension_numbers = #tpu.dot_dimension_numbers<[1], [0], [0], [1], [0, 0, 1, 1], [], []>} : vector<8x8xbf16>, vector<8x32xbf16>, vector<8x32xf32> -> vector<8x32xf32>
    %89 = arith.addf %69, %88 : vector<8x32xf32>
    %90 = vector.extract_strided_slice %26 {offsets = [0, 24], sizes = [8, 8], strides = [1, 1]} : vector<8x32xbf16> to vector<8x8xbf16>
    %91 = vector.extract_strided_slice %27 {offsets = [0, 24], sizes = [8, 8], strides = [1, 1]} : vector<8x32xbf16> to vector<8x8xbf16>
    %92 = vector.extract_strided_slice %28 {offsets = [0, 24], sizes = [8, 8], strides = [1, 1]} : vector<8x32xbf16> to vector<8x8xbf16>
    %cst_43 = arith.constant dense<0.000000e+00> : vector<8x8xf32>
    %93 = tpu.matmul %90, %91, %cst_43 {dimension_numbers = #tpu.dot_dimension_numbers<[1], [1], [0], [0], [0, 0, 1, 0], [], []>} : vector<8x8xbf16>, vector<8x8xbf16>, vector<8x8xf32> -> vector<8x8xf32>
    %cst_44 = arith.constant dense<0xFF800000> : vector<8xf32>
    %94 = vector.multi_reduction <maximumf>, %93, %cst_44 [1] : vector<8x8xf32> to vector<8xf32>
    %95 = vector.shape_cast %94 : vector<8xf32> to vector<8x1xf32>
    %96 = vector.broadcast %95 : vector<8x1xf32> to vector<8x8xf32>
    %97 = arith.subf %93, %96 : vector<8x8xf32>
    %98 = math.exp %97 : vector<8x8xf32>
    %cst_45 = arith.constant dense<0.000000e+00> : vector<8xf32>
    %99 = vector.multi_reduction <add>, %98, %cst_45 [1] : vector<8x8xf32> to vector<8xf32>
    %100 = vector.shape_cast %99 : vector<8xf32> to vector<8x1xf32>
    %101 = tpu.reciprocal %100 {approx = true} : vector<8x1xf32> -> vector<8x1xf32>
    %102 = vector.broadcast %101 : vector<8x1xf32> to vector<8x8xf32>
    %103 = arith.mulf %98, %102 : vector<8x8xf32>
    %104 = arith.truncf %103 : vector<8x8xf32> to vector<8x8xbf16>
    %cst_46 = arith.constant dense<0.000000e+00> : vector<8x8xf32>
    %105 = tpu.matmul %104, %92, %cst_46 {dimension_numbers = #tpu.dot_dimension_numbers<[1], [0], [0], [1], [0, 0, 1, 1], [], []>} : vector<8x8xbf16>, vector<8x8xbf16>, vector<8x8xf32> -> vector<8x8xf32>
    %106 = arith.truncf %105 : vector<8x8xf32> to vector<8x8xbf16>
    %c24 = arith.constant 24 : index
    %c0_47 = arith.constant 0 : index
    %107 = vector.load %arg11[%c24, %c0_47] : memref<32x32xbf16, #tpu.memory_space<vmem>>, vector<8x32xbf16>
    %cst_48 = arith.constant dense<0.000000e+00> : vector<8x32xf32>
    %108 = tpu.matmul %106, %107, %cst_48 {dimension_numbers = #tpu.dot_dimension_numbers<[1], [0], [0], [1], [0, 0, 1, 1], [], []>} : vector<8x8xbf16>, vector<8x32xbf16>, vector<8x32xf32> -> vector<8x32xf32>
    %109 = arith.addf %89, %108 : vector<8x32xf32>
    %c0_49 = arith.constant 0 : index
    %c0_50 = arith.constant 0 : index
    %110 = vector.load %arg12[%c0_49, %c0_50] : memref<1x32xf32, #tpu.memory_space<vmem>>, vector<1x32xf32>
    %111 = vector.broadcast %110 : vector<1x32xf32> to vector<8x32xf32>
    %112 = arith.addf %109, %111 : vector<8x32xf32>
    %c0_51 = arith.constant 0 : index
    %c0_52 = arith.constant 0 : index
    %c0_53 = arith.constant 0 : index
    %113 = vector.load %arg13[%c0_51, %c0_52, %c0_53] : memref<1x8x32xf32, #tpu.memory_space<vmem>>, vector<1x8x32xf32>
    %114 = vector.shape_cast %113 : vector<1x8x32xf32> to vector<8x32xf32>
    %115 = vector.shape_cast %112 : vector<8x32xf32> to vector<1x8x32xf32>
    tpu.vector_store %arg13[%c0_51, %c0_52, %c0_53], %115 {strides = array<i32>} : memref<1x8x32xf32, #tpu.memory_space<vmem>>, vector<1x8x32xf32>,
    return
  }
  func.func @transform_0(%arg0: i32, %arg1: i32) -> (i32, i32, i32) {
    %c0_i32 = arith.constant 0 : i32
    %c0_i32_0 = arith.constant 0 : i32
    return %arg0, %arg1, %c0_i32 : i32, i32, i32
  }
  func.func @transform_1(%arg0: i32, %arg1: i32) -> (i32, i32, i32) {
    %c0_i32 = arith.constant 0 : i32
    %c0_i32_0 = arith.constant 0 : i32
    %c0_i32_1 = arith.constant 0 : i32
    return %arg0, %c0_i32, %c0_i32_0 : i32, i32, i32
  }
  func.func @transform_2(%arg0: i32, %arg1: i32) -> (i32, i32, i32) {
    %c0_i32 = arith.constant 0 : i32
    %c0_i32_0 = arith.constant 0 : i32
    %c0_i32_1 = arith.constant 0 : i32
    return %arg0, %c0_i32, %c0_i32_0 : i32, i32, i32
  }
  func.func @transform_3(%arg0: i32, %arg1: i32) -> (i32, i32) {
    %c0_i32 = arith.constant 0 : i32
    %c0_i32_0 = arith.constant 0 : i32
    %c0_i32_1 = arith.constant 0 : i32
    return %c0_i32, %c0_i32_0 : i32, i32
  }
  func.func @transform_4(%arg0: i32, %arg1: i32) -> (i32, i32) {
    %c0_i32 = arith.constant 0 : i32
    %c0_i32_0 = arith.constant 0 : i32
    %c0_i32_1 = arith.constant 0 : i32
    return %c0_i32, %c0_i32_0 : i32, i32
  }
  func.func @transform_5(%arg0: i32, %arg1: i32) -> (i32, i32) {
    %c0_i32 = arith.constant 0 : i32
    %c0_i32_0 = arith.constant 0 : i32
    %c0_i32_1 = arith.constant 0 : i32
    return %c0_i32, %c0_i32_0 : i32, i32
  }
  func.func @transform_6(%arg0: i32, %arg1: i32) -> (i32, i32) {
    %c0_i32 = arith.constant 0 : i32
    %c0_i32_0 = arith.constant 0 : i32
    %c0_i32_1 = arith.constant 0 : i32
    return %c0_i32, %c0_i32_0 : i32, i32
  }
  func.func @transform_7(%arg0: i32, %arg1: i32) -> (i32, i32) {
    %c0_i32 = arith.constant 0 : i32
    %c0_i32_0 = arith.constant 0 : i32
    %c0_i32_1 = arith.constant 0 : i32
    return %c0_i32, %c0_i32_0 : i32, i32
  }
  func.func @transform_8(%arg0: i32, %arg1: i32) -> (i32, i32) {
    %c0_i32 = arith.constant 0 : i32
    %c0_i32_0 = arith.constant 0 : i32
    %c0_i32_1 = arith.constant 0 : i32
    return %c0_i32, %c0_i32_0 : i32, i32
  }
  func.func @transform_9(%arg0: i32, %arg1: i32) -> (i32, i32) {
    %c0_i32 = arith.constant 0 : i32
    %c0_i32_0 = arith.constant 0 : i32
    %c0_i32_1 = arith.constant 0 : i32
    return %c0_i32, %c0_i32_0 : i32, i32
  }
  func.func @transform_10(%arg0: i32, %arg1: i32) -> (i32, i32) {
    %c0_i32 = arith.constant 0 : i32
    %c0_i32_0 = arith.constant 0 : i32
    %c0_i32_1 = arith.constant 0 : i32
    return %c0_i32, %c0_i32_0 : i32, i32
  }
  func.func @transform_11(%arg0: i32, %arg1: i32) -> (i32, i32, i32) {
    %c0_i32 = arith.constant 0 : i32
    %c0_i32_0 = arith.constant 0 : i32
    return %arg0, %arg1, %c0_i32 : i32, i32, i32
  }
}

</mosaic_0001>

<llo_original>
// kernel: tpu_custom_call.1
$region0: #{tpu_custom_call.1}
  #allocation0 [shape = 'u32[]', space=smem, size = 0x4, offset = 0x4, fixed_abs, tag = 'smem constant byte address 0x4 - core index']
  #allocation1 [shape = 'u32[144,128]{1,0:T(1,128)}', space=vmem, size = 0x12000, scoped, tag = 'internal scratch']
  %s0 = inlined_call_operand.hbm [shape: f32[2,8,32], index: 0, kind: input, shape index: {}]
  %s1 = inlined_call_operand.hbm [shape: f32[2,8,32], index: 1, kind: input, shape index: {}]
  %s2 = inlined_call_operand.hbm [shape: f32[2,8,32], index: 2, kind: input, shape index: {}]
  %s3 = inlined_call_operand.hbm [shape: bf16[32,32], index: 3, kind: input, shape index: {}]
  %s4 = inlined_call_operand.vmem [shape: f32[1,32], index: 4, kind: input, shape index: {}]
  %s5 = inlined_call_operand.vmem [shape: bf16[32,32], index: 5, kind: input, shape index: {}]
  %s6 = inlined_call_operand.vmem [shape: f32[1,32], index: 6, kind: input, shape index: {}]
  %s7 = inlined_call_operand.hbm [shape: bf16[32,32], index: 7, kind: input, shape index: {}]
  %s8 = inlined_call_operand.hbm [shape: f32[1,32], index: 8, kind: input, shape index: {}]
  %s9 = inlined_call_operand.vmem [shape: bf16[32,32], index: 9, kind: input, shape index: {}]
  %s10 = inlined_call_operand.vmem [shape: f32[1,32], index: 10, kind: input, shape index: {}]
  %s11 = inlined_call_operand.hbm [shape: f32[2,8,32], index: 11, kind: output, shape index: {}]
  %s12 = sld [smem:[#allocation0]]
  $region101: #{tpu_custom_call.1} parent=0
    _
  %s14 = ssub.s32 1, %s12
  %s15 = scalar_select 0, %s14, %s12
  $region1: #{tpu_custom_call.1} parent=0
    #allocation2 [shape = 'u8[8192]{0}', space=vmem, size = 0x2000, scoped, tag = 'input window, operand 0']
    #allocation3 [shape = 's32[2]{0}', space=sflag, size = 0x8, scoped, tag = 'scoped memory for tpu_custom_call.1']
    #allocation4 [shape = 's32[2]{0}', space=sflag, size = 0x8, scoped, tag = 'scoped memory for tpu_custom_call.1']
    #allocation5 [shape = 'u8[8192]{0}', space=vmem, size = 0x2000, scoped, tag = 'input window, operand 1']
    #allocation6 [shape = 's32[2]{0}', space=sflag, size = 0x8, scoped, tag = 'scoped memory for tpu_custom_call.1']
    #allocation7 [shape = 'u8[8192]{0}', space=vmem, size = 0x2000, scoped, tag = 'input window, operand 2']
    #allocation8 [shape = 'u8[8192]{0}', space=vmem, size = 0x2000, scoped, tag = 'input window, operand 3, single buffered']
    #allocation9 [shape = 's32[1]{0}', space=sflag, size = 0x4, scoped, tag = 'scoped memory for tpu_custom_call.1']
    #allocation10 [shape = 'u8[8192]{0}', space=vmem, size = 0x2000, scoped, tag = 'input window, operand 7, single buffered']
    #allocation11 [shape = 'u8[512]{0}', space=vmem, size = 0x400, scoped, tag = 'input window, operand 8, single buffered']
    #allocation12 [shape = 's32[1]{0}', space=sflag, size = 0x4, scoped, tag = 'scoped memory for tpu_custom_call.1']
    #allocation13 [shape = 'u8[8192]{0}', space=vmem, size = 0x2000, scoped, tag = 'output window, operand 0']
    %16 = vsyncpa [#allocation3], 0
    %s17 = scalar_lea.sflag [#allocation3], 1
    %18 = vsyncpa %s17, 0
    %19 = vsyncpa [#allocation6], 0
    %s20 = scalar_lea.sflag [#allocation6], 1
    %21 = vsyncpa %s20, 0
    %22 = vsyncpa [#allocation9], 0
    %23 = vsyncpa [#allocation12], 0
    %24 = vsyncpa [#allocation4], 0
    %s25 = scalar_lea.sflag [#allocation4], 1
    %26 = vsyncpa %s25, 0
    loop: start=0, step=1, limit=4
    $region2: #{tpu_custom_call.1} parent=1 // loop_pre_header
      _
    $region3: #{tpu_custom_call.1} parent=1 // loop_header
      %s28 = sphi 0, %s32
      %p29 = scmp.ge.s32.totalorder %s28, 4
      %s35 = sphi 0, %s47
      %s36 = sphi 0, %s43
      %s37 = sphi 0, %s35
      %s38 = sphi 0, %s36
      %s39 = sphi 0, %s37
      %s40 = sphi 0, %s38
      %s52 = sphi 0, %s54
      %s55 = sphi 0, %s52
      %s56 = sphi 0, %s55
      %s72 = sphi 0, %s56
      %s78 = sphi 0, %s80
      %s81 = sphi 0, %s78
      %s82 = sphi 0, %s81
      %s98 = sphi 0, %s82
      %s104 = sphi 0, %s106
      %s107 = sphi 0, %s104
      %s108 = sphi 0, %s107
      %s124 = sphi 0, %s108
      %s128 = sphi 0, %s128
      %s130 = sphi 0, %s128
      %s131 = sphi 0, %s130
      %s145 = sphi 0, %s131
      %s149 = sphi 0, %s149
      %s151 = sphi 0, %s149
      %s152 = sphi 0, %s151
      %s166 = sphi 0, %s152
      %s170 = sphi 0, %s170
      %s172 = sphi 0, %s170
      %s173 = sphi 0, %s172
      %s187 = sphi 0, %s173
      %s191 = sphi 0, %s191
      %s193 = sphi 0, %s191
      %s194 = sphi 0, %s193
      %s208 = sphi 0, %s194
      %s212 = sphi 0, %s212
      %s214 = sphi 0, %s212
      %s215 = sphi 0, %s214
      %s229 = sphi 0, %s215
      %s233 = sphi 0, %s233
      %s235 = sphi 0, %s233
      %s236 = sphi 0, %s235
      %s250 = sphi 0, %s236
      %s254 = sphi 0, %s254
      %s256 = sphi 0, %s254
      %s257 = sphi 0, %s256
      %s271 = sphi 0, %s257
      %s275 = sphi 0, %s275
      %s277 = sphi 0, %s275
      %s278 = sphi 0, %s277
      %s292 = sphi 0, %s278
      %s300 = sphi 0, %s302
      %s303 = sphi 0, %s300
      %s304 = sphi 0, %s303
      %s320 = sphi 0, %s304
    $region4: #{tpu_custom_call.1} parent=1 // loop_header_branch
      %31 = sbr.rel (%p29) target = $region8
    $region5: #{tpu_custom_call.1} parent=1 // loop_body
      %s33 = ssub.s32 %s28, 1
      %s34 = ssub.s32 %s28, 2
      %s41 = sadd.s32 1, %s36
      %p42 = scmp.ge.s32.totalorder %s41, 1
      %s43 = scalar_select %p42, 0, %s41
      %s44 = sadd.s32 1, %s35
      %s45 = scalar_select %p42, %s44, %s35
      %p46 = scmp.ge.s32.totalorder %s45, 2
      %s47 = scalar_select %p46, 0, %s45
      %s48 = ssub.s32 %s35, %s47
      %s49 = ssub.s32 %s36, %s43
      %s50 = sor.u32 %s48, %s49
      %p51 = scmp.eq.s32.totalorder %s50, 0
      %s53 = sadd.s32 %s52, 1
      %s54 = scalar_select %p51, %s52, %s53
      %p57 = pneg %p51
      %p58 = scmp.eq.s32.totalorder %s28, 1
      %p59 = por %p57, %p58
      %p60 = scmp.ne.s32.totalorder %s52, %s55
      %p61 = scmp.eq.s32.totalorder %s28, 0
      %p62 = por %p60, %p61
      %p63 = scmp.ne.s32.totalorder %s52, %s55
      %p64 = scmp.eq.s32.totalorder %s33, 1
      %p65 = por %p63, %p64
      %p66 = scmp.ne.s32.totalorder %s55, %s56
      %p67 = scmp.eq.s32.totalorder %s33, 0
      %p68 = por %p66, %p67
      %p69 = scmp.ne.s32.totalorder %s55, %s56
      %p70 = scmp.eq.s32.totalorder %s34, 1
      %p71 = por %p69, %p70
      %p73 = scmp.ne.s32.totalorder %s56, %s72
      %p74 = scmp.eq.s32.totalorder %s34, 0
      %p75 = por %p73, %p74
      %s76 = ssub.s32 %s35, %s47
      %p77 = scmp.eq.s32.totalorder %s76, 0
      %s79 = sadd.s32 %s78, 1
      %s80 = scalar_select %p77, %s78, %s79
      %p83 = pneg %p77
      %p84 = scmp.eq.s32.totalorder %s28, 1
      %p85 = por %p83, %p84
      %p86 = scmp.ne.s32.totalorder %s78, %s81
      %p87 = scmp.eq.s32.totalorder %s28, 0
      %p88 = por %p86, %p87
      %p89 = scmp.ne.s32.totalorder %s78, %s81
      %p90 = scmp.eq.s32.totalorder %s33, 1
      %p91 = por %p89, %p90
      %p92 = scmp.ne.s32.totalorder %s81, %s82
      %p93 = scmp.eq.s32.totalorder %s33, 0
      %p94 = por %p92, %p93
      %p95 = scmp.ne.s32.totalorder %s81, %s82
      %p96 = scmp.eq.s32.totalorder %s34, 1
      %p97 = por %p95, %p96
      %p99 = scmp.ne.s32.totalorder %s82, %s98
      %p100 = scmp.eq.s32.totalorder %s34, 0
      %p101 = por %p99, %p100
      %s102 = ssub.s32 %s35, %s47
      %p103 = scmp.eq.s32.totalorder %s102, 0
      %s105 = sadd.s32 %s104, 1
      %s106 = scalar_select %p103, %s104, %s105
      %p109 = pneg %p103
      %p110 = scmp.eq.s32.totalorder %s28, 1
      %p111 = por %p109, %p110
      %p112 = scmp.ne.s32.totalorder %s104, %s107
      %p113 = scmp.eq.s32.totalorder %s28, 0
      %p114 = por %p112, %p113
      %p115 = scmp.ne.s32.totalorder %s104, %s107
      %p116 = scmp.eq.s32.totalorder %s33, 1
      %p117 = por %p115, %p116
      %p118 = scmp.ne.s32.totalorder %s107, %s108
      %p119 = scmp.eq.s32.totalorder %s33, 0
      %p120 = por %p118, %p119
      %p121 = scmp.ne.s32.totalorder %s107, %s108
      %p122 = scmp.eq.s32.totalorder %s34, 1
      %p123 = por %p121, %p122
      %p125 = scmp.ne.s32.totalorder %s108, %s124
      %p126 = scmp.eq.s32.totalorder %s34, 0
      %p127 = por %p125, %p126
      %s129 = sadd.s32 %s128, 1
      %p132 = scmp.eq.s32.totalorder %s28, 1
      %p133 = scmp.ne.s32.totalorder %s128, %s130
      %p134 = scmp.eq.s32.totalorder %s28, 0
      %p135 = por %p133, %p134
      %p136 = scmp.ne.s32.totalorder %s128, %s130
      %p137 = scmp.eq.s32.totalorder %s33, 1
      %p138 = por %p136, %p137
      %p139 = scmp.ne.s32.totalorder %s130, %s131
      %p140 = scmp.eq.s32.totalorder %s33, 0
      %p141 = por %p139, %p140
      %p142 = scmp.ne.s32.totalorder %s130, %s131
      %p143 = scmp.eq.s32.totalorder %s34, 1
      %p144 = por %p142, %p143
      %p146 = scmp.ne.s32.totalorder %s131, %s145
      %p147 = scmp.eq.s32.totalorder %s34, 0
      %p148 = por %p146, %p147
      %s150 = sadd.s32 %s149, 1
      %p153 = scmp.eq.s32.totalorder %s28, 1
      %p154 = scmp.ne.s32.totalorder %s149, %s151
      %p155 = scmp.eq.s32.totalorder %s28, 0
      %p156 = por %p154, %p155
      %p157 = scmp.ne.s32.totalorder %s149, %s151
      %p158 = scmp.eq.s32.totalorder %s33, 1
      %p159 = por %p157, %p158
      %p160 = scmp.ne.s32.totalorder %s151, %s152
      %p161 = scmp.eq.s32.totalorder %s33, 0
      %p162 = por %p160, %p161
      %p163 = scmp.ne.s32.totalorder %s151, %s152
      %p164 = scmp.eq.s32.totalorder %s34, 1
      %p165 = por %p163, %p164
      %p167 = scmp.ne.s32.totalorder %s152, %s166
      %p168 = scmp.eq.s32.totalorder %s34, 0
      %p169 = por %p167, %p168
      %s171 = sadd.s32 %s170, 1
      %p174 = scmp.eq.s32.totalorder %s28, 1
      %p175 = scmp.ne.s32.totalorder %s170, %s172
      %p176 = scmp.eq.s32.totalorder %s28, 0
      %p177 = por %p175, %p176
      %p178 = scmp.ne.s32.totalorder %s170, %s172
      %p179 = scmp.eq.s32.totalorder %s33, 1
      %p180 = por %p178, %p179
      %p181 = scmp.ne.s32.totalorder %s172, %s173
      %p182 = scmp.eq.s32.totalorder %s33, 0
      %p183 = por %p181, %p182
      %p184 = scmp.ne.s32.totalorder %s172, %s173
      %p185 = scmp.eq.s32.totalorder %s34, 1
      %p186 = por %p184, %p185
      %p188 = scmp.ne.s32.totalorder %s173, %s187
      %p189 = scmp.eq.s32.totalorder %s34, 0
      %p190 = por %p188, %p189
      %s192 = sadd.s32 %s191, 1
      %p195 = scmp.eq.s32.totalorder %s28, 1
      %p196 = scmp.ne.s32.totalorder %s191, %s193
      %p197 = scmp.eq.s32.totalorder %s28, 0
      %p198 = por %p196, %p197
      %p199 = scmp.ne.s32.totalorder %s191, %s193
      %p200 = scmp.eq.s32.totalorder %s33, 1
      %p201 = por %p199, %p200
      %p202 = scmp.ne.s32.totalorder %s193, %s194
      %p203 = scmp.eq.s32.totalorder %s33, 0
      %p204 = por %p202, %p203
      %p205 = scmp.ne.s32.totalorder %s193, %s194
      %p206 = scmp.eq.s32.totalorder %s34, 1
      %p207 = por %p205, %p206
      %p209 = scmp.ne.s32.totalorder %s194, %s208
      %p210 = scmp.eq.s32.totalorder %s34, 0
      %p211 = por %p209, %p210
      %s213 = sadd.s32 %s212, 1
      %p216 = scmp.eq.s32.totalorder %s28, 1
      %p217 = scmp.ne.s32.totalorder %s212, %s214
      %p218 = scmp.eq.s32.totalorder %s28, 0
      %p219 = por %p217, %p218
      %p220 = scmp.ne.s32.totalorder %s212, %s214
      %p221 = scmp.eq.s32.totalorder %s33, 1
      %p222 = por %p220, %p221
      %p223 = scmp.ne.s32.totalorder %s214, %s215
      %p224 = scmp.eq.s32.totalorder %s33, 0
      %p225 = por %p223, %p224
      %p226 = scmp.ne.s32.totalorder %s214, %s215
      %p227 = scmp.eq.s32.totalorder %s34, 1
      %p228 = por %p226, %p227
      %p230 = scmp.ne.s32.totalorder %s215, %s229
      %p231 = scmp.eq.s32.totalorder %s34, 0
      %p232 = por %p230, %p231
      %s234 = sadd.s32 %s233, 1
      %p237 = scmp.eq.s32.totalorder %s28, 1
      %p238 = scmp.ne.s32.totalorder %s233, %s235
      %p239 = scmp.eq.s32.totalorder %s28, 0
      %p240 = por %p238, %p239
      %p241 = scmp.ne.s32.totalorder %s233, %s235
      %p242 = scmp.eq.s32.totalorder %s33, 1
      %p243 = por %p241, %p242
      %p244 = scmp.ne.s32.totalorder %s235, %s236
      %p245 = scmp.eq.s32.totalorder %s33, 0
      %p246 = por %p244, %p245
      %p247 = scmp.ne.s32.totalorder %s235, %s236
      %p248 = scmp.eq.s32.totalorder %s34, 1
      %p249 = por %p247, %p248
      %p251 = scmp.ne.s32.totalorder %s236, %s250
      %p252 = scmp.eq.s32.totalorder %s34, 0
      %p253 = por %p251, %p252
      %s255 = sadd.s32 %s254, 1
      %p258 = scmp.eq.s32.totalorder %s28, 1
      %p259 = scmp.ne.s32.totalorder %s254, %s256
      %p260 = scmp.eq.s32.totalorder %s28, 0
      %p261 = por %p259, %p260
      %p262 = scmp.ne.s32.totalorder %s254, %s256
      %p263 = scmp.eq.s32.totalorder %s33, 1
      %p264 = por %p262, %p263
      %p265 = scmp.ne.s32.totalorder %s256, %s257
      %p266 = scmp.eq.s32.totalorder %s33, 0
      %p267 = por %p265, %p266
      %p268 = scmp.ne.s32.totalorder %s256, %s257
      %p269 = scmp.eq.s32.totalorder %s34, 1
      %p270 = por %p268, %p269
      %p272 = scmp.ne.s32.totalorder %s257, %s271
      %p273 = scmp.eq.s32.totalorder %s34, 0
      %p274 = por %p272, %p273
      %s276 = sadd.s32 %s275, 1
      %p279 = scmp.eq.s32.totalorder %s28, 1
      %p280 = scmp.ne.s32.totalorder %s275, %s277
      %p281 = scmp.eq.s32.totalorder %s28, 0
      %p282 = por %p280, %p281
      %p283 = scmp.ne.s32.totalorder %s275, %s277
      %p284 = scmp.eq.s32.totalorder %s33, 1
      %p285 = por %p283, %p284
      %p286 = scmp.ne.s32.totalorder %s277, %s278
      %p287 = scmp.eq.s32.totalorder %s33, 0
      %p288 = por %p286, %p287
      %p289 = scmp.ne.s32.totalorder %s277, %s278
      %p290 = scmp.eq.s32.totalorder %s34, 1
      %p291 = por %p289, %p290
      %p293 = scmp.ne.s32.totalorder %s278, %s292
      %p294 = scmp.eq.s32.totalorder %s34, 0
      %p295 = por %p293, %p294
      %s296 = ssub.s32 %s35, %s47
      %s297 = ssub.s32 %s36, %s43
      %s298 = sor.u32 %s296, %s297
      %p299 = scmp.eq.s32.totalorder %s298, 0
      %s301 = sadd.s32 %s300, 1
      %s302 = scalar_select %p299, %s300, %s301
      %p305 = pneg %p299
      %p306 = scmp.eq.s32.totalorder %s28, 1
      %p307 = por %p305, %p306
      %p308 = scmp.ne.s32.totalorder %s300, %s303
      %p309 = scmp.eq.s32.totalorder %s28, 0
      %p310 = por %p308, %p309
      %p311 = scmp.ne.s32.totalorder %s300, %s303
      %p312 = scmp.eq.s32.totalorder %s33, 1
      %p313 = por %p311, %p312
      %p314 = scmp.ne.s32.totalorder %s303, %s304
      %p315 = scmp.eq.s32.totalorder %s33, 0
      %p316 = por %p314, %p315
      %p317 = scmp.ne.s32.totalorder %s303, %s304
      %p318 = scmp.eq.s32.totalorder %s34, 1
      %p319 = por %p317, %p318
      %p321 = scmp.ne.s32.totalorder %s304, %s320
      %p322 = scmp.eq.s32.totalorder %s34, 0
      %p323 = por %p321, %p322
      %p324 = scmp.le.s32.totalorder 1, %s28
      %p325 = scmp.lt.s32.totalorder %s28, 3
      %p326 = pnand %p324, %p325
      %p327 = pneg %p326
      // Predicated region
      $region9: #{tpu_custom_call.1} parent=5 // pred_check
        _
      $region10: #{tpu_custom_call.1} parent=5 // pred_check_branch
        %329 = sbr.rel (%p326) target = $region12
      $region11: #{tpu_custom_call.1} parent=5 // pred_region
        %s330 = ssub.s32 %s28, 1
        // Predicated region
        $region13: #{tpu_custom_call.1} parent=11 // pred_check
          %p331 = pneg %p141
        $region14: #{tpu_custom_call.1} parent=11 // pred_check_branch
          %333 = sbr.rel (%p331) target = $region16
        $region15: #{tpu_custom_call.1} parent=11 // pred_region
          %s335 = ssub.s32 256, 256
          %336 = vsyncadd [#allocation9], %s335
          %s337 = sshll.u32 [#allocation8], 4
          %s338 = int_to_ptr.vmem [resolvable:$true] %s337
          %343 = dma.hbm_to_vmem [thread:$0]  %s3, 256, %s338, [#allocation9], 64, 64, 4
        $region16: #{tpu_custom_call.1} parent=11 // pred_fallthru
          _
        // Predicated region
        $region17: #{tpu_custom_call.1} parent=11 // pred_check
          %p344 = pneg %p162
        $region18: #{tpu_custom_call.1} parent=11 // pred_check_branch
          %346 = sbr.rel (%p344) target = $region20
        $region19: #{tpu_custom_call.1} parent=11 // pred_region
          _
        $region20: #{tpu_custom_call.1} parent=11 // pred_fallthru
          _
        // Predicated region
        $region21: #{tpu_custom_call.1} parent=11 // pred_check
          %p347 = pneg %p183
        $region22: #{tpu_custom_call.1} parent=11 // pred_check_branch
          %349 = sbr.rel (%p347) target = $region24
        $region23: #{tpu_custom_call.1} parent=11 // pred_region
          _
        $region24: #{tpu_custom_call.1} parent=11 // pred_fallthru
          _
        // Predicated region
        $region25: #{tpu_custom_call.1} parent=11 // pred_check
          %p350 = pneg %p204
        $region26: #{tpu_custom_call.1} parent=11 // pred_check_branch
          %352 = sbr.rel (%p350) target = $region28
        $region27: #{tpu_custom_call.1} parent=11 // pred_region
          _
        $region28: #{tpu_custom_call.1} parent=11 // pred_fallthru
          _
        // Predicated region
        $region29: #{tpu_custom_call.1} parent=11 // pred_check
          %p353 = pneg %p225
        $region30: #{tpu_custom_call.1} parent=11 // pred_check_branch
          %355 = sbr.rel (%p353) target = $region32
        $region31: #{tpu_custom_call.1} parent=11 // pred_region
          %s357 = ssub.s32 256, 256
          %358 = vsyncadd [#allocation9], %s357
          %s359 = sshll.u32 [#allocation10], 4
          %s360 = int_to_ptr.vmem [resolvable:$true] %s359
          %365 = dma.hbm_to_vmem [thread:$0]  %s7, 256, %s360, [#allocation9], 64, 64, 4
        $region32: #{tpu_custom_call.1} parent=11 // pred_fallthru
          _
        // Predicated region
        $region33: #{tpu_custom_call.1} parent=11 // pred_check
          %p366 = pneg %p246
        $region34: #{tpu_custom_call.1} parent=11 // pred_check_branch
          %368 = sbr.rel (%p366) target = $region36
        $region35: #{tpu_custom_call.1} parent=11 // pred_region
          %s370 = ssub.s32 16, 16
          %371 = vsyncadd [#allocation12], %s370
          %s373 = sshll.u32 [#allocation11], 4
          %s374 = int_to_ptr.vmem [resolvable:$true] %s373
          %376 = dma.hbm_to_vmem [thread:$0]  %s8, 16, %s374, [#allocation12]
        $region36: #{tpu_custom_call.1} parent=11 // pred_fallthru
          _
        // Predicated region
        $region37: #{tpu_custom_call.1} parent=11 // pred_check
          %p377 = pneg %p267
        $region38: #{tpu_custom_call.1} parent=11 // pred_check_branch
          %379 = sbr.rel (%p377) target = $region40
        $region39: #{tpu_custom_call.1} parent=11 // pred_region
          _
        $region40: #{tpu_custom_call.1} parent=11 // pred_fallthru
          _
        // Predicated region
        $region41: #{tpu_custom_call.1} parent=11 // pred_check
          %p380 = pneg %p288
        $region42: #{tpu_custom_call.1} parent=11 // pred_check_branch
          %382 = sbr.rel (%p380) target = $region44
        $region43: #{tpu_custom_call.1} parent=11 // pred_region
          _
        $region44: #{tpu_custom_call.1} parent=11 // pred_fallthru
          _
      $region12: #{tpu_custom_call.1} parent=5 // pred_fallthru
        _
      %p383 = scmp.lt.s32.totalorder %s28, 2
      // Predicated region
      $region45: #{tpu_custom_call.1} parent=5 // pred_check
        %p384 = pneg %p383
      $region46: #{tpu_custom_call.1} parent=5 // pred_check_branch
        %386 = sbr.rel (%p384) target = $region48
      $region47: #{tpu_custom_call.1} parent=5 // pred_region
        // Predicated region
        $region49: #{tpu_custom_call.1} parent=47 // pred_check
          %p387 = pneg %p62
        $region50: #{tpu_custom_call.1} parent=47 // pred_check_branch
          %389 = sbr.rel (%p387) target = $region52
        $region51: #{tpu_custom_call.1} parent=47 // pred_region
          %s390 = sand.u32 %s52, 1
          %s391 = scalar_lea.sflag [#allocation3], %s390
          %s392 = sand.u32 %s52, 1
          %s393 = smul.addr %s392, 8
          %s394 = scalar_lea.vmem [#allocation2], %s393
          %s396 = ssub.s32 128, 128
          %397 = vsyncadd %s391, %s396
          %s398 = sadd.s32 %s36, %s35
          %s399 = smul.addr %s398, 128
          %s400 = scalar_lea.hbm %s0, %s399
          %s402 = sshll.u32 %s394, 4
          %s403 = int_to_ptr.vmem [resolvable:$true] %s402
          %405 = dma.hbm_to_vmem [thread:$0]  %s400, 128, %s403, %s391
        $region52: #{tpu_custom_call.1} parent=47 // pred_fallthru
          _
        // Predicated region
        $region53: #{tpu_custom_call.1} parent=47 // pred_check
          %p406 = pneg %p88
        $region54: #{tpu_custom_call.1} parent=47 // pred_check_branch
          %408 = sbr.rel (%p406) target = $region56
        $region55: #{tpu_custom_call.1} parent=47 // pred_region
          %s409 = sand.u32 %s28, 1
          %s410 = scalar_lea.sflag [#allocation6], %s409
          %s411 = sand.u32 %s78, 1
          %s412 = smul.addr %s411, 8
          %s413 = scalar_lea.vmem [#allocation5], %s412
          %s415 = ssub.s32 128, 128
          %416 = vsyncadd %s410, %s415
          %s417 = smul.addr %s35, 128
          %s418 = scalar_lea.hbm %s1, %s417
          %s420 = sshll.u32 %s413, 4
          %s421 = int_to_ptr.vmem [resolvable:$true] %s420
          %423 = dma.hbm_to_vmem [thread:$0]  %s418, 128, %s421, %s410
        $region56: #{tpu_custom_call.1} parent=47 // pred_fallthru
          _
        // Predicated region
        $region57: #{tpu_custom_call.1} parent=47 // pred_check
          %p424 = pneg %p114
        $region58: #{tpu_custom_call.1} parent=47 // pred_check_branch
          %426 = sbr.rel (%p424) target = $region60
        $region59: #{tpu_custom_call.1} parent=47 // pred_region
          %s427 = sand.u32 %s28, 1
          %s428 = scalar_lea.sflag [#allocation6], %s427
          %s429 = sand.u32 %s104, 1
          %s430 = smul.addr %s429, 8
          %s431 = scalar_lea.vmem [#allocation7], %s430
          %s433 = ssub.s32 128, 128
          %434 = vsyncadd %s428, %s433
          %s435 = smul.addr %s35, 128
          %s436 = scalar_lea.hbm %s2, %s435
          %s438 = sshll.u32 %s431, 4
          %s439 = int_to_ptr.vmem [resolvable:$true] %s438
          %441 = dma.hbm_to_vmem [thread:$0]  %s436, 128, %s439, %s428
        $region60: #{tpu_custom_call.1} parent=47 // pred_fallthru
          _
      $region48: #{tpu_custom_call.1} parent=5 // pred_fallthru
        _
      %p442 = scmp.le.s32.totalorder 1, %s28
      %p443 = scmp.lt.s32.totalorder %s28, 3
      %p444 = pnand %p442, %p443
      %p445 = pneg %p444
      // Predicated region
      $region61: #{tpu_custom_call.1} parent=5 // pred_check
        _
      $region62: #{tpu_custom_call.1} parent=5 // pred_check_branch
        %447 = sbr.rel (%p444) target = $region64
      $region63: #{tpu_custom_call.1} parent=5 // pred_region
        %s448 = ssub.s32 %s28, 1
        %s449 = sand.u32 %s55, 1
        %s450 = scalar_lea.sflag [#allocation3], %s449
        %s451 = sand.u32 %s55, 1
        %s452 = smul.addr %s451, 8
        %s453 = scalar_lea.vmem [#allocation2], %s452
        // Predicated region
        $region65: #{tpu_custom_call.1} parent=63 // pred_check
          %p454 = pneg %p68
        $region66: #{tpu_custom_call.1} parent=63 // pred_check_branch
          %456 = sbr.rel (%p454) target = $region68
        $region67: #{tpu_custom_call.1} parent=63 // pred_region
          %457 = dma.done %s450, 128
        $region68: #{tpu_custom_call.1} parent=63 // pred_fallthru
          _
        %s458 = sand.u32 %s33, 1
        %s459 = scalar_lea.sflag [#allocation6], %s458
        %s460 = sand.u32 %s81, 1
        %s461 = smul.addr %s460, 8
        %s462 = scalar_lea.vmem [#allocation5], %s461
        // Predicated region
        $region69: #{tpu_custom_call.1} parent=63 // pred_check
          %p463 = pneg %p94
        $region70: #{tpu_custom_call.1} parent=63 // pred_check_branch
          %465 = sbr.rel (%p463) target = $region72
        $region71: #{tpu_custom_call.1} parent=63 // pred_region
          %466 = dma.done %s459, 128
        $region72: #{tpu_custom_call.1} parent=63 // pred_fallthru
          _
        %s467 = sand.u32 %s33, 1
        %s468 = scalar_lea.sflag [#allocation6], %s467
        %s469 = sand.u32 %s107, 1
        %s470 = smul.addr %s469, 8
        %s471 = scalar_lea.vmem [#allocation7], %s470
        // Predicated region
        $region73: #{tpu_custom_call.1} parent=63 // pred_check
          %p472 = pneg %p120
        $region74: #{tpu_custom_call.1} parent=63 // pred_check_branch
          %474 = sbr.rel (%p472) target = $region76
        $region75: #{tpu_custom_call.1} parent=63 // pred_region
          %475 = dma.done %s468, 128
        $region76: #{tpu_custom_call.1} parent=63 // pred_fallthru
          _
        // Predicated region
        $region77: #{tpu_custom_call.1} parent=63 // pred_check
          %p476 = pneg %p141
        $region78: #{tpu_custom_call.1} parent=63 // pred_check_branch
          %478 = sbr.rel (%p476) target = $region80
        $region79: #{tpu_custom_call.1} parent=63 // pred_region
          %479 = dma.done [#allocation9], 256
        $region80: #{tpu_custom_call.1} parent=63 // pred_fallthru
          _
        // Predicated region
        $region81: #{tpu_custom_call.1} parent=63 // pred_check
          %p480 = pneg %p225
        $region82: #{tpu_custom_call.1} parent=63 // pred_check_branch
          %482 = sbr.rel (%p480) target = $region84
        $region83: #{tpu_custom_call.1} parent=63 // pred_region
          %483 = dma.done [#allocation9], 256
        $region84: #{tpu_custom_call.1} parent=63 // pred_fallthru
          _
        // Predicated region
        $region85: #{tpu_custom_call.1} parent=63 // pred_check
          %p484 = pneg %p246
        $region86: #{tpu_custom_call.1} parent=63 // pred_check_branch
          %486 = sbr.rel (%p484) target = $region88
        $region87: #{tpu_custom_call.1} parent=63 // pred_region
          %487 = dma.done [#allocation12], 16
        $region88: #{tpu_custom_call.1} parent=63 // pred_fallthru
          _
        %s488 = sand.u32 %s55, 1
        %s489 = scalar_lea.sflag [#allocation3], %s488
        %s490 = sand.u32 %s55, 1
        %s491 = smul.addr %s490, 8
        %s492 = scalar_lea.vmem [#allocation2], %s491
        %p493 = pneg %p68
        %p494 = pneg %p65
        %s495 = sand.u32 %s33, 1
        %s496 = scalar_lea.sflag [#allocation6], %s495
        %s497 = sand.u32 %s81, 1
        %s498 = smul.addr %s497, 8
        %s499 = scalar_lea.vmem [#allocation5], %s498
        %p500 = pneg %p94
        %p501 = pneg %p91
        %s502 = sand.u32 %s33, 1
        %s503 = scalar_lea.sflag [#allocation6], %s502
        %s504 = sand.u32 %s107, 1
        %s505 = smul.addr %s504, 8
        %s506 = scalar_lea.vmem [#allocation7], %s505
        %p507 = pneg %p120
        %p508 = pneg %p117
        %p509 = pneg %p141
        %p510 = pneg %p138
        %p511 = pneg %p162
        %p512 = pneg %p159
        %p513 = pneg %p183
        %p514 = pneg %p180
        %p515 = pneg %p204
        %p516 = pneg %p201
        %p517 = pneg %p225
        %p518 = pneg %p222
        %p519 = pneg %p246
        %p520 = pneg %p243
        %p521 = pneg %p267
        %p522 = pneg %p264
        %p523 = pneg %p288
        %p524 = pneg %p285
        %p525 = pneg %p316
        %p526 = pneg %p313
        %s527 = sand.u32 %s303, 1
        %s528 = scalar_lea.sflag [#allocation4], %s527
        %s529 = sand.u32 %s303, 1
        %s530 = smul.addr %s529, 8
        %s531 = scalar_lea.vmem [#allocation13], %s530
        %v533 = vld [vmem:[%s453] sm:$0xff]
        %v534 = vpack.c.bf16 %v533, %v533
        %v535 = vld [vmem:[%s462] sm:$0xff]
        %v536 = vpack.c.bf16 %v535, %v535
        %v537 = vld [vmem:[%s471] sm:$0xff]
        %v538 = vpack.c.bf16 %v537, %v537
        %v539 = vld [vmem:[#allocation8] sm:$0xf]
        %v540 = vld [vmem:[#allocation8 + $0x4] sm:$0xf]
        %v541 = vld [vmem:[#allocation8 + $0x8] sm:$0xf]
        %v542 = vld [vmem:[#allocation8 + $0xc] sm:$0xf]
        %v543 = vld [vmem:[%s4] sm:$0x1]
        %v545 = vlaneseq
        %v546 = vshrl.u32 %v545, 7
        %v547 = vsub.s32 0, %v546
        %v548 = vrot.slane %v543, %v547
        %v554 = vunpack.c.l.b16 %v539
        %v555 = vunpack.c.l.b16 %v540
        %v556 = vunpack.c.l.b16 %v541
        %v557 = vunpack.c.l.b16 %v542
        %v558 = vpack.c.b16 %v555, %v554
        %v559 = vpack.c.b16 %v557, %v556
        %vm562 = vcmask 261120
        %v564 = vsel %vm562, %v534, 0
        %566 = vmatprep.subr.bf16.mxu0 0
        %567 = vmatpush1.bf16.msra.mxu0 %v558
        %568 = vmatprep.subr.bf16.mxu0 0
        %569 = vmatpush1.bf16.msra.mxu0 %v559
        %570 = vmatprep.subr.bf16.mxu0 0
        %571 = vmatpush1.bf16.msra.mxu0 0
        %572 = vmatprep.subr.bf16.mxu0 0
        %573 = vmatpush1.bf16.msra.mxu0 0
        %574 = vmatprep.subr.bf16.mxu0 0
        %575 = vmatpush1.bf16.msra.mxu0 0
        %576 = vmatprep.subr.bf16.mxu0 0
        %577 = vmatpush1.bf16.msra.mxu0 0
        %578 = vmatprep.subr.bf16.mxu0 0
        %579 = vmatpush1.bf16.msra.mxu0 0
        %580 = vmatprep.subr.bf16.mxu0 0
        %581 = vmatpush1.bf16.msra.mxu0 0
        %582 = vmatprep.subr.bf16.mxu0 0
        %583 = vmatpush1.bf16.msra.mxu0 0
        %584 = vmatprep.subr.bf16.mxu0 0
        %585 = vmatpush1.bf16.msra.mxu0 0
        %586 = vmatprep.subr.bf16.mxu0 0
        %587 = vmatpush1.bf16.msra.mxu0 0
        %588 = vmatprep.subr.bf16.mxu0 0
        %589 = vmatpush1.bf16.msra.mxu0 0
        %590 = vmatprep.subr.bf16.mxu0 0
        %591 = vmatpush1.bf16.msra.mxu0 0
        %592 = vmatprep.subr.bf16.mxu0 0
        %593 = vmatpush1.bf16.msra.mxu0 0
        %594 = vmatprep.subr.bf16.mxu0 0
        %595 = vmatpush1.bf16.msra.mxu0 0
        %596 = vmatprep.subr.bf16.mxu0 0
        %597 = vmatpush1.bf16.msra.mxu0 0
        %598 = vmatprep.mubr.bf16.mxu0 0
        %599 = vmatmul.mubr.bf16.gmra.mrb[0].mxu0 %v564
        %v600 = vpop.f32.mrb[0].mxu0
        %v601 = vadd.f32 %v548, %v600
        %v602 = vpop.f32.mrb[0].mxu0
        %v603 = vpop.f32.mrb[0].mxu0
        %v604 = vpop.f32.mrb[0].mxu0
        %605 = vdwg.mxu0
        %v606 = vmul.f32 %v601, 0.35355338
        %v607 = vld [vmem:[%s5] sm:$0xf]
        %v608 = vld [vmem:[%s5 + $0x4] sm:$0xf]
        %v609 = vld [vmem:[%s5 + $0x8] sm:$0xf]
        %v610 = vld [vmem:[%s5 + $0xc] sm:$0xf]
        %v611 = vld [vmem:[%s6] sm:$0x1]
        %v613 = vlaneseq
        %v614 = vshrl.u32 %v613, 7
        %v615 = vsub.s32 0, %v614
        %v616 = vrot.slane %v611, %v615
        %v622 = vunpack.c.l.b16 %v607
        %v623 = vunpack.c.l.b16 %v608
        %v624 = vunpack.c.l.b16 %v609
        %v625 = vunpack.c.l.b16 %v610
        %v626 = vpack.c.b16 %v623, %v622
        %v627 = vpack.c.b16 %v625, %v624
        %v631 = vsel %vm562, %v536, 0
        %633 = vmatprep.subr.bf16.mxu0 0
        %634 = vmatpush1.bf16.msra.mxu0 %v626
        %635 = vmatprep.subr.bf16.mxu0 0
        %636 = vmatpush1.bf16.msra.mxu0 %v627
        %637 = vmatprep.subr.bf16.mxu0 0
        %638 = vmatpush1.bf16.msra.mxu0 0
        %639 = vmatprep.subr.bf16.mxu0 0
        %640 = vmatpush1.bf16.msra.mxu0 0
        %641 = vmatprep.subr.bf16.mxu0 0
        %642 = vmatpush1.bf16.msra.mxu0 0
        %643 = vmatprep.subr.bf16.mxu0 0
        %644 = vmatpush1.bf16.msra.mxu0 0
        %645 = vmatprep.subr.bf16.mxu0 0
        %646 = vmatpush1.bf16.msra.mxu0 0
        %647 = vmatprep.subr.bf16.mxu0 0
        %648 = vmatpush1.bf16.msra.mxu0 0
        %649 = vmatprep.subr.bf16.mxu0 0
        %650 = vmatpush1.bf16.msra.mxu0 0
        %651 = vmatprep.subr.bf16.mxu0 0
        %652 = vmatpush1.bf16.msra.mxu0 0
        %653 = vmatprep.subr.bf16.mxu0 0
        %654 = vmatpush1.bf16.msra.mxu0 0
        %655 = vmatprep.subr.bf16.mxu0 0
        %656 = vmatpush1.bf16.msra.mxu0 0
        %657 = vmatprep.subr.bf16.mxu0 0
        %658 = vmatpush1.bf16.msra.mxu0 0
        %659 = vmatprep.subr.bf16.mxu0 0
        %660 = vmatpush1.bf16.msra.mxu0 0
        %661 = vmatprep.subr.bf16.mxu0 0
        %662 = vmatpush1.bf16.msra.mxu0 0
        %663 = vmatprep.subr.bf16.mxu0 0
        %664 = vmatpush1.bf16.msra.mxu0 0
        %665 = vmatprep.mubr.bf16.mxu0 0
        %666 = vmatmul.mubr.bf16.gmra.mrb[0].mxu0 %v631
        %v667 = vpop.f32.mrb[0].mxu0
        %v668 = vadd.f32 %v616, %v667
        %v669 = vpop.f32.mrb[0].mxu0
        %v670 = vpop.f32.mrb[0].mxu0
        %v671 = vpop.f32.mrb[0].mxu0
        %672 = vdwg.mxu0
        %v673 = vld [vmem:[#allocation10] sm:$0xf]
        %v674 = vld [vmem:[#allocation10 + $0x4] sm:$0xf]
        %v675 = vld [vmem:[#allocation10 + $0x8] sm:$0xf]
        %v676 = vld [vmem:[#allocation10 + $0xc] sm:$0xf]
        %v677 = vld [vmem:[#allocation11] sm:$0x1]
        %v679 = vlaneseq
        %v680 = vshrl.u32 %v679, 7
        %v681 = vsub.s32 0, %v680
        %v682 = vrot.slane %v677, %v681
        %v688 = vunpack.c.l.b16 %v673
        %v689 = vunpack.c.l.b16 %v674
        %v690 = vunpack.c.l.b16 %v675
        %v691 = vunpack.c.l.b16 %v676
        %v692 = vpack.c.b16 %v689, %v688
        %v693 = vpack.c.b16 %v691, %v690
        %v697 = vsel %vm562, %v538, 0
        %699 = vmatprep.subr.bf16.mxu0 0
        %700 = vmatpush1.bf16.msra.mxu0 %v692
        %701 = vmatprep.subr.bf16.mxu0 0
        %702 = vmatpush1.bf16.msra.mxu0 %v693
        %703 = vmatprep.subr.bf16.mxu0 0
        %704 = vmatpush1.bf16.msra.mxu0 0
        %705 = vmatprep.subr.bf16.mxu0 0
        %706 = vmatpush1.bf16.msra.mxu0 0
        %707 = vmatprep.subr.bf16.mxu0 0
        %708 = vmatpush1.bf16.msra.mxu0 0
        %709 = vmatprep.subr.bf16.mxu0 0
        %710 = vmatpush1.bf16.msra.mxu0 0
        %711 = vmatprep.subr.bf16.mxu0 0
        %712 = vmatpush1.bf16.msra.mxu0 0
        %713 = vmatprep.subr.bf16.mxu0 0
        %714 = vmatpush1.bf16.msra.mxu0 0
        %715 = vmatprep.subr.bf16.mxu0 0
        %716 = vmatpush1.bf16.msra.mxu0 0
        %717 = vmatprep.subr.bf16.mxu0 0
        %718 = vmatpush1.bf16.msra.mxu0 0
        %719 = vmatprep.subr.bf16.mxu0 0
        %720 = vmatpush1.bf16.msra.mxu0 0
        %721 = vmatprep.subr.bf16.mxu0 0
        %722 = vmatpush1.bf16.msra.mxu0 0
        %723 = vmatprep.subr.bf16.mxu0 0
        %724 = vmatpush1.bf16.msra.mxu0 0
        %725 = vmatprep.subr.bf16.mxu0 0
        %726 = vmatpush1.bf16.msra.mxu0 0
        %727 = vmatprep.subr.bf16.mxu0 0
        %728 = vmatpush1.bf16.msra.mxu0 0
        %729 = vmatprep.subr.bf16.mxu0 0
        %730 = vmatpush1.bf16.msra.mxu0 0
        %731 = vmatprep.mubr.bf16.mxu0 0
        %732 = vmatmul.mubr.bf16.gmra.mrb[0].mxu0 %v697
        %v733 = vpop.f32.mrb[0].mxu0
        %v734 = vadd.f32 %v682, %v733
        %v735 = vpop.f32.mrb[0].mxu0
        %v736 = vpop.f32.mrb[0].mxu0
        %v737 = vpop.f32.mrb[0].mxu0
        %738 = vdwg.mxu0
        %v739 = vpack.c.bf16 %v606, %v606
        %v740 = vpack.c.bf16 %v668, %v668
        %v741 = vpack.c.bf16 %v734, %v734
        %vm742 = vcmask 64512
        %v744 = vsel %vm742, %v739, 0
        %v747 = vsel %vm742, %v740, 0
        %749 = vmatprep.subr.bf16.mxu0 0
        %750 = vmatpush1.bf16.xpose.msra.mxu0 %v747
        %751 = vmatprep.subr.bf16.mxu0 0
        %752 = vmatpush1.bf16.xpose.msra.mxu0 0
        %753 = vmatprep.subr.bf16.mxu0 0
        %754 = vmatpush1.bf16.xpose.msra.mxu0 0
        %755 = vmatprep.subr.bf16.mxu0 0
        %756 = vmatpush1.bf16.xpose.msra.mxu0 0
        %757 = vmatprep.subr.bf16.mxu0 0
        %758 = vmatpush1.bf16.xpose.msra.mxu0 0
        %759 = vmatprep.subr.bf16.mxu0 0
        %760 = vmatpush1.bf16.xpose.msra.mxu0 0
        %761 = vmatprep.subr.bf16.mxu0 0
        %762 = vmatpush1.bf16.xpose.msra.mxu0 0
        %763 = vmatprep.subr.bf16.mxu0 0
        %764 = vmatpush1.bf16.xpose.msra.mxu0 0
        %765 = vmatprep.subr.bf16.mxu0 0
        %766 = vmatpush1.bf16.xpose.msra.mxu0 0
        %767 = vmatprep.subr.bf16.mxu0 0
        %768 = vmatpush1.bf16.xpose.msra.mxu0 0
        %769 = vmatprep.subr.bf16.mxu0 0
        %770 = vmatpush1.bf16.xpose.msra.mxu0 0
        %771 = vmatprep.subr.bf16.mxu0 0
        %772 = vmatpush1.bf16.xpose.msra.mxu0 0
        %773 = vmatprep.subr.bf16.mxu0 0
        %774 = vmatpush1.bf16.xpose.msra.mxu0 0
        %775 = vmatprep.subr.bf16.mxu0 0
        %776 = vmatpush1.bf16.xpose.msra.mxu0 0
        %777 = vmatprep.subr.bf16.mxu0 0
        %778 = vmatpush1.bf16.xpose.msra.mxu0 0
        %779 = vmatprep.subr.bf16.mxu0 0
        %780 = vmatpush1.bf16.xpose.msra.mxu0 0
        %781 = vmatprep.mubr.bf16.mxu0 0
        %782 = vmatmul.mubr.bf16.gmra.mrb[0].mxu0 %v744
        %v783 = vpop.f32.mrb[0].mxu0
        %v784 = vadd.f32 0.0, %v783
        %v785 = vpop.f32.mrb[0].mxu0
        %v786 = vpop.f32.mrb[0].mxu0
        %v787 = vpop.f32.mrb[0].mxu0
        %788 = vdwg.mxu0
        %v789 = vsel %vm742, %v784, -inf
        %790 = vmax.xlane.f32.xlu0 %v789
        %v791 = vpop.xlane.xlu0 %790
        %v792 = vsub.f32 %v784, %v791
        %v793 = vmul.f32 %v792, 1.442695
        %v794 = vpow.pop %v793
        %v795 = vsel %vm742, %v794, 0.0
        %796 = vadd.xlane.f32.xlu0 %v795
        %v797 = vpop.xlane.xlu0 %796
        %v798 = vrcp.pop %v797
        %v799 = vmul.f32 %v794, %v798
        %v800 = vpack.c.bf16 %v799, %v799
        %v802 = vsel %vm742, %v800, 0
        %vm804 = vcmask 1043456
        %v806 = vsel %vm804, %v741, 0
        %808 = vmatprep.subr.bf16.mxu0 0
        %809 = vmatpush1.bf16.msra.mxu0 %v806
        %810 = vmatprep.subr.bf16.mxu0 0
        %811 = vmatpush1.bf16.msra.mxu0 0
        %812 = vmatprep.subr.bf16.mxu0 0
        %813 = vmatpush1.bf16.msra.mxu0 0
        %814 = vmatprep.subr.bf16.mxu0 0
        %815 = vmatpush1.bf16.msra.mxu0 0
        %816 = vmatprep.subr.bf16.mxu0 0
        %817 = vmatpush1.bf16.msra.mxu0 0
        %818 = vmatprep.subr.bf16.mxu0 0
        %819 = vmatpush1.bf16.msra.mxu0 0
        %820 = vmatprep.subr.bf16.mxu0 0
        %821 = vmatpush1.bf16.msra.mxu0 0
        %822 = vmatprep.subr.bf16.mxu0 0
        %823 = vmatpush1.bf16.msra.mxu0 0
        %824 = vmatprep.subr.bf16.mxu0 0
        %825 = vmatpush1.bf16.msra.mxu0 0
        %826 = vmatprep.subr.bf16.mxu0 0
        %827 = vmatpush1.bf16.msra.mxu0 0
        %828 = vmatprep.subr.bf16.mxu0 0
        %829 = vmatpush1.bf16.msra.mxu0 0
        %830 = vmatprep.subr.bf16.mxu0 0
        %831 = vmatpush1.bf16.msra.mxu0 0
        %832 = vmatprep.subr.bf16.mxu0 0
        %833 = vmatpush1.bf16.msra.mxu0 0
        %834 = vmatprep.subr.bf16.mxu0 0
        %835 = vmatpush1.bf16.msra.mxu0 0
        %836 = vmatprep.subr.bf16.mxu0 0
        %837 = vmatpush1.bf16.msra.mxu0 0
        %838 = vmatprep.subr.bf16.mxu0 0
        %839 = vmatpush1.bf16.msra.mxu0 0
        %840 = vmatprep.mubr.bf16.mxu0 0
        %841 = vmatmul.mubr.bf16.gmra.mrb[0].mxu0 %v802
        %v842 = vpop.f32.mrb[0].mxu0
        %v843 = vadd.f32 0.0, %v842
        %v844 = vpop.f32.mrb[0].mxu0
        %v845 = vpop.f32.mrb[0].mxu0
        %v846 = vpop.f32.mrb[0].mxu0
        %847 = vdwg.mxu0
        %v848 = vpack.c.bf16 %v843, %v843
        %v849 = vld [vmem:[%s9] sm:$0xf]
        %851 = vrot.lane.b32.xlu0 %v739, 120
        %v852 = vpop.permute.xlu0 %851
        %854 = vrot.lane.b32.xlu0 %v740, 120
        %v855 = vpop.permute.xlu0 %854
        %v857 = vsel %vm742, %v852, 0
        %v860 = vsel %vm742, %v855, 0
        %862 = vmatprep.subr.bf16.mxu0 0
        %863 = vmatpush1.bf16.xpose.msra.mxu0 %v860
        %864 = vmatprep.subr.bf16.mxu0 0
        %865 = vmatpush1.bf16.xpose.msra.mxu0 0
        %866 = vmatprep.subr.bf16.mxu0 0
        %867 = vmatpush1.bf16.xpose.msra.mxu0 0
        %868 = vmatprep.subr.bf16.mxu0 0
        %869 = vmatpush1.bf16.xpose.msra.mxu0 0
        %870 = vmatprep.subr.bf16.mxu0 0
        %871 = vmatpush1.bf16.xpose.msra.mxu0 0
        %872 = vmatprep.subr.bf16.mxu0 0
        %873 = vmatpush1.bf16.xpose.msra.mxu0 0
        %874 = vmatprep.subr.bf16.mxu0 0
        %875 = vmatpush1.bf16.xpose.msra.mxu0 0
        %876 = vmatprep.subr.bf16.mxu0 0
        %877 = vmatpush1.bf16.xpose.msra.mxu0 0
        %878 = vmatprep.subr.bf16.mxu0 0
        %879 = vmatpush1.bf16.xpose.msra.mxu0 0
        %880 = vmatprep.subr.bf16.mxu0 0
        %881 = vmatpush1.bf16.xpose.msra.mxu0 0
        %882 = vmatprep.subr.bf16.mxu0 0
        %883 = vmatpush1.bf16.xpose.msra.mxu0 0
        %884 = vmatprep.subr.bf16.mxu0 0
        %885 = vmatpush1.bf16.xpose.msra.mxu0 0
        %886 = vmatprep.subr.bf16.mxu0 0
        %887 = vmatpush1.bf16.xpose.msra.mxu0 0
        %888 = vmatprep.subr.bf16.mxu0 0
        %889 = vmatpush1.bf16.xpose.msra.mxu0 0
        %890 = vmatprep.subr.bf16.mxu0 0
        %891 = vmatpush1.bf16.xpose.msra.mxu0 0
        %892 = vmatprep.subr.bf16.mxu0 0
        %893 = vmatpush1.bf16.xpose.msra.mxu0 0
        %894 = vmatprep.mubr.bf16.mxu0 0
        %895 = vmatmul.mubr.bf16.gmra.mrb[0].mxu0 %v857
        %v896 = vpop.f32.mrb[0].mxu0
        %v897 = vadd.f32 0.0, %v896
        %v898 = vpop.f32.mrb[0].mxu0
        %v899 = vpop.f32.mrb[0].mxu0
        %v900 = vpop.f32.mrb[0].mxu0
        %901 = vdwg.mxu0
        %v902 = vsel %vm742, %v897, -inf
        %903 = vmax.xlane.f32.xlu0 %v902
        %v904 = vpop.xlane.xlu0 %903
        %v905 = vsub.f32 %v897, %v904
        %v906 = vmul.f32 %v905, 1.442695
        %v907 = vpow.pop %v906
        %v908 = vsel %vm742, %v907, 0.0
        %909 = vadd.xlane.f32.xlu0 %v908
        %v910 = vpop.xlane.xlu0 %909
        %v911 = vrcp.pop %v910
        %v912 = vmul.f32 %v907, %v911
        %v913 = vpack.c.bf16 %v912, %v912
        %915 = vrot.lane.b32.xlu0 %v741, 120
        %v916 = vpop.permute.xlu0 %915
        %v918 = vsel %vm742, %v913, 0
        %v921 = vsel %vm804, %v916, 0
        %923 = vmatprep.subr.bf16.mxu0 0
        %924 = vmatpush1.bf16.msra.mxu0 %v921
        %925 = vmatprep.subr.bf16.mxu0 0
        %926 = vmatpush1.bf16.msra.mxu0 0
        %927 = vmatprep.subr.bf16.mxu0 0
        %928 = vmatpush1.bf16.msra.mxu0 0
        %929 = vmatprep.subr.bf16.mxu0 0
        %930 = vmatpush1.bf16.msra.mxu0 0
        %931 = vmatprep.subr.bf16.mxu0 0
        %932 = vmatpush1.bf16.msra.mxu0 0
        %933 = vmatprep.subr.bf16.mxu0 0
        %934 = vmatpush1.bf16.msra.mxu0 0
        %935 = vmatprep.subr.bf16.mxu0 0
        %936 = vmatpush1.bf16.msra.mxu0 0
        %937 = vmatprep.subr.bf16.mxu0 0
        %938 = vmatpush1.bf16.msra.mxu0 0
        %939 = vmatprep.subr.bf16.mxu0 0
        %940 = vmatpush1.bf16.msra.mxu0 0
        %941 = vmatprep.subr.bf16.mxu0 0
        %942 = vmatpush1.bf16.msra.mxu0 0
        %943 = vmatprep.subr.bf16.mxu0 0
        %944 = vmatpush1.bf16.msra.mxu0 0
        %945 = vmatprep.subr.bf16.mxu0 0
        %946 = vmatpush1.bf16.msra.mxu0 0
        %947 = vmatprep.subr.bf16.mxu0 0
        %948 = vmatpush1.bf16.msra.mxu0 0
        %949 = vmatprep.subr.bf16.mxu0 0
        %950 = vmatpush1.bf16.msra.mxu0 0
        %951 = vmatprep.subr.bf16.mxu0 0
        %952 = vmatpush1.bf16.msra.mxu0 0
        %953 = vmatprep.subr.bf16.mxu0 0
        %954 = vmatpush1.bf16.msra.mxu0 0
        %955 = vmatprep.mubr.bf16.mxu0 0
        %956 = vmatmul.mubr.bf16.gmra.mrb[0].mxu0 %v918
        %v957 = vpop.f32.mrb[0].mxu0
        %v958 = vadd.f32 0.0, %v957
        %v959 = vpop.f32.mrb[0].mxu0
        %v960 = vpop.f32.mrb[0].mxu0
        %v961 = vpop.f32.mrb[0].mxu0
        %962 = vdwg.mxu0
        %v963 = vpack.c.bf16 %v958, %v958
        %v964 = vld [vmem:[%s9 + $0x4] sm:$0xf]
        %v966 = vsel %vm742, %v963, 0
        %v969 = vsel %vm804, %v964, 0
        %971 = vmatprep.subr.bf16.mxu0 0
        %972 = vmatpush1.bf16.msra.mxu0 %v969
        %973 = vmatprep.subr.bf16.mxu0 0
        %974 = vmatpush1.bf16.msra.mxu0 0
        %975 = vmatprep.subr.bf16.mxu0 0
        %976 = vmatpush1.bf16.msra.mxu0 0
        %977 = vmatprep.subr.bf16.mxu0 0
        %978 = vmatpush1.bf16.msra.mxu0 0
        %979 = vmatprep.subr.bf16.mxu0 0
        %980 = vmatpush1.bf16.msra.mxu0 0
        %981 = vmatprep.subr.bf16.mxu0 0
        %982 = vmatpush1.bf16.msra.mxu0 0
        %983 = vmatprep.subr.bf16.mxu0 0
        %984 = vmatpush1.bf16.msra.mxu0 0
        %985 = vmatprep.subr.bf16.mxu0 0
        %986 = vmatpush1.bf16.msra.mxu0 0
        %987 = vmatprep.subr.bf16.mxu0 0
        %988 = vmatpush1.bf16.msra.mxu0 0
        %989 = vmatprep.subr.bf16.mxu0 0
        %990 = vmatpush1.bf16.msra.mxu0 0
        %991 = vmatprep.subr.bf16.mxu0 0
        %992 = vmatpush1.bf16.msra.mxu0 0
        %993 = vmatprep.subr.bf16.mxu0 0
        %994 = vmatpush1.bf16.msra.mxu0 0
        %995 = vmatprep.subr.bf16.mxu0 0
        %996 = vmatpush1.bf16.msra.mxu0 0
        %997 = vmatprep.subr.bf16.mxu0 0
        %998 = vmatpush1.bf16.msra.mxu0 0
        %999 = vmatprep.subr.bf16.mxu0 0
        %1000 = vmatpush1.bf16.msra.mxu0 0
        %1001 = vmatprep.subr.bf16.mxu0 0
        %1002 = vmatpush1.bf16.msra.mxu0 0
        %1003 = vmatprep.mubr.bf16.mxu0 0
        %1004 = vmatmul.mubr.bf16.gmra.mrb[0].mxu0 %v966
        %v1005 = vpop.f32.mrb[0].mxu0
        %v1006 = vadd.f32 0.0, %v1005
        %v1007 = vpop.f32.mrb[0].mxu0
        %v1008 = vpop.f32.mrb[0].mxu0
        %v1009 = vpop.f32.mrb[0].mxu0
        %1010 = vdwg.mxu0
        %v1012 = vsel %vm742, %v848, 0
        %v1015 = vsel %vm804, %v849, 0
        %1017 = vmatprep.subr.bf16.mxu0 0
        %1018 = vmatpush1.bf16.msra.mxu0 %v1015
        %1019 = vmatprep.subr.bf16.mxu0 0
        %1020 = vmatpush1.bf16.msra.mxu0 0
        %1021 = vmatprep.subr.bf16.mxu0 0
        %1022 = vmatpush1.bf16.msra.mxu0 0
        %1023 = vmatprep.subr.bf16.mxu0 0
        %1024 = vmatpush1.bf16.msra.mxu0 0
        %1025 = vmatprep.subr.bf16.mxu0 0
        %1026 = vmatpush1.bf16.msra.mxu0 0
        %1027 = vmatprep.subr.bf16.mxu0 0
        %1028 = vmatpush1.bf16.msra.mxu0 0
        %1029 = vmatprep.subr.bf16.mxu0 0
        %1030 = vmatpush1.bf16.msra.mxu0 0
        %1031 = vmatprep.subr.bf16.mxu0 0
        %1032 = vmatpush1.bf16.msra.mxu0 0
        %1033 = vmatprep.subr.bf16.mxu0 0
        %1034 = vmatpush1.bf16.msra.mxu0 0
        %1035 = vmatprep.subr.bf16.mxu0 0
        %1036 = vmatpush1.bf16.msra.mxu0 0
        %1037 = vmatprep.subr.bf16.mxu0 0
        %1038 = vmatpush1.bf16.msra.mxu0 0
        %1039 = vmatprep.subr.bf16.mxu0 0
        %1040 = vmatpush1.bf16.msra.mxu0 0
        %1041 = vmatprep.subr.bf16.mxu0 0
        %1042 = vmatpush1.bf16.msra.mxu0 0
        %1043 = vmatprep.subr.bf16.mxu0 0
        %1044 = vmatpush1.bf16.msra.mxu0 0
        %1045 = vmatprep.subr.bf16.mxu0 0
        %1046 = vmatpush1.bf16.msra.mxu0 0
        %1047 = vmatprep.subr.bf16.mxu0 0
        %1048 = vmatpush1.bf16.msra.mxu0 0
        %1049 = vmatprep.mubr.bf16.mxu0 0
        %1050 = vmatmul.mubr.bf16.gmra.mrb[0].mxu0 %v1012
        %v1051 = vpop.f32.mrb[0].mxu0
        %v1052 = vadd.f32 %v1006, %v1051
        %v1053 = vpop.f32.mrb[0].mxu0
        %v1054 = vpop.f32.mrb[0].mxu0
        %v1055 = vpop.f32.mrb[0].mxu0
        %1056 = vdwg.mxu0
        %1057 = vrot.lane.b32.xlu0 %v739, 112
        %v1058 = vpop.permute.xlu0 %1057
        %1059 = vrot.lane.b32.xlu0 %v740, 112
        %v1060 = vpop.permute.xlu0 %1059
        %v1062 = vsel %vm742, %v1058, 0
        %v1065 = vsel %vm742, %v1060, 0
        %1067 = vmatprep.subr.bf16.mxu0 0
        %1068 = vmatpush1.bf16.xpose.msra.mxu0 %v1065
        %1069 = vmatprep.subr.bf16.mxu0 0
        %1070 = vmatpush1.bf16.xpose.msra.mxu0 0
        %1071 = vmatprep.subr.bf16.mxu0 0
        %1072 = vmatpush1.bf16.xpose.msra.mxu0 0
        %1073 = vmatprep.subr.bf16.mxu0 0
        %1074 = vmatpush1.bf16.xpose.msra.mxu0 0
        %1075 = vmatprep.subr.bf16.mxu0 0
        %1076 = vmatpush1.bf16.xpose.msra.mxu0 0
        %1077 = vmatprep.subr.bf16.mxu0 0
        %1078 = vmatpush1.bf16.xpose.msra.mxu0 0
        %1079 = vmatprep.subr.bf16.mxu0 0
        %1080 = vmatpush1.bf16.xpose.msra.mxu0 0
        %1081 = vmatprep.subr.bf16.mxu0 0
        %1082 = vmatpush1.bf16.xpose.msra.mxu0 0
        %1083 = vmatprep.subr.bf16.mxu0 0
        %1084 = vmatpush1.bf16.xpose.msra.mxu0 0
        %1085 = vmatprep.subr.bf16.mxu0 0
        %1086 = vmatpush1.bf16.xpose.msra.mxu0 0
        %1087 = vmatprep.subr.bf16.mxu0 0
        %1088 = vmatpush1.bf16.xpose.msra.mxu0 0
        %1089 = vmatprep.subr.bf16.mxu0 0
        %1090 = vmatpush1.bf16.xpose.msra.mxu0 0
        %1091 = vmatprep.subr.bf16.mxu0 0
        %1092 = vmatpush1.bf16.xpose.msra.mxu0 0
        %1093 = vmatprep.subr.bf16.mxu0 0
        %1094 = vmatpush1.bf16.xpose.msra.mxu0 0
        %1095 = vmatprep.subr.bf16.mxu0 0
        %1096 = vmatpush1.bf16.xpose.msra.mxu0 0
        %1097 = vmatprep.subr.bf16.mxu0 0
        %1098 = vmatpush1.bf16.xpose.msra.mxu0 0
        %1099 = vmatprep.mubr.bf16.mxu0 0
        %1100 = vmatmul.mubr.bf16.gmra.mrb[0].mxu0 %v1062
        %v1101 = vpop.f32.mrb[0].mxu0
        %v1102 = vadd.f32 0.0, %v1101
        %v1103 = vpop.f32.mrb[0].mxu0
        %v1104 = vpop.f32.mrb[0].mxu0
        %v1105 = vpop.f32.mrb[0].mxu0
        %1106 = vdwg.mxu0
        %v1107 = vsel %vm742, %v1102, -inf
        %1108 = vmax.xlane.f32.xlu0 %v1107
        %v1109 = vpop.xlane.xlu0 %1108
        %v1110 = vsub.f32 %v1102, %v1109
        %v1111 = vmul.f32 %v1110, 1.442695
        %v1112 = vpow.pop %v1111
        %v1113 = vsel %vm742, %v1112, 0.0
        %1114 = vadd.xlane.f32.xlu0 %v1113
        %v1115 = vpop.xlane.xlu0 %1114
        %v1116 = vrcp.pop %v1115
        %v1117 = vmul.f32 %v1112, %v1116
        %v1118 = vpack.c.bf16 %v1117, %v1117
        %1119 = vrot.lane.b32.xlu0 %v741, 112
        %v1120 = vpop.permute.xlu0 %1119
        %v1122 = vsel %vm742, %v1118, 0
        %v1125 = vsel %vm804, %v1120, 0
        %1127 = vmatprep.subr.bf16.mxu0 0
        %1128 = vmatpush1.bf16.msra.mxu0 %v1125
        %1129 = vmatprep.subr.bf16.mxu0 0
        %1130 = vmatpush1.bf16.msra.mxu0 0
        %1131 = vmatprep.subr.bf16.mxu0 0
        %1132 = vmatpush1.bf16.msra.mxu0 0
        %1133 = vmatprep.subr.bf16.mxu0 0
        %1134 = vmatpush1.bf16.msra.mxu0 0
        %1135 = vmatprep.subr.bf16.mxu0 0
        %1136 = vmatpush1.bf16.msra.mxu0 0
        %1137 = vmatprep.subr.bf16.mxu0 0
        %1138 = vmatpush1.bf16.msra.mxu0 0
        %1139 = vmatprep.subr.bf16.mxu0 0
        %1140 = vmatpush1.bf16.msra.mxu0 0
        %1141 = vmatprep.subr.bf16.mxu0 0
        %1142 = vmatpush1.bf16.msra.mxu0 0
        %1143 = vmatprep.subr.bf16.mxu0 0
        %1144 = vmatpush1.bf16.msra.mxu0 0
        %1145 = vmatprep.subr.bf16.mxu0 0
        %1146 = vmatpush1.bf16.msra.mxu0 0
        %1147 = vmatprep.subr.bf16.mxu0 0
        %1148 = vmatpush1.bf16.msra.mxu0 0
        %1149 = vmatprep.subr.bf16.mxu0 0
        %1150 = vmatpush1.bf16.msra.mxu0 0
        %1151 = vmatprep.subr.bf16.mxu0 0
        %1152 = vmatpush1.bf16.msra.mxu0 0
        %1153 = vmatprep.subr.bf16.mxu0 0
        %1154 = vmatpush1.bf16.msra.mxu0 0
        %1155 = vmatprep.subr.bf16.mxu0 0
        %1156 = vmatpush1.bf16.msra.mxu0 0
        %1157 = vmatprep.subr.bf16.mxu0 0
        %1158 = vmatpush1.bf16.msra.mxu0 0
        %1159 = vmatprep.mubr.bf16.mxu0 0
        %1160 = vmatmul.mubr.bf16.gmra.mrb[0].mxu0 %v1122
        %v1161 = vpop.f32.mrb[0].mxu0
        %v1162 = vadd.f32 0.0, %v1161
        %v1163 = vpop.f32.mrb[0].mxu0
        %v1164 = vpop.f32.mrb[0].mxu0
        %v1165 = vpop.f32.mrb[0].mxu0
        %1166 = vdwg.mxu0
        %v1167 = vpack.c.bf16 %v1162, %v1162
        %v1168 = vld [vmem:[%s9 + $0x8] sm:$0xf]
        %v1170 = vsel %vm742, %v1167, 0
        %v1173 = vsel %vm804, %v1168, 0
        %1175 = vmatprep.subr.bf16.mxu0 0
        %1176 = vmatpush1.bf16.msra.mxu0 %v1173
        %1177 = vmatprep.subr.bf16.mxu0 0
        %1178 = vmatpush1.bf16.msra.mxu0 0
        %1179 = vmatprep.subr.bf16.mxu0 0
        %1180 = vmatpush1.bf16.msra.mxu0 0
        %1181 = vmatprep.subr.bf16.mxu0 0
        %1182 = vmatpush1.bf16.msra.mxu0 0
        %1183 = vmatprep.subr.bf16.mxu0 0
        %1184 = vmatpush1.bf16.msra.mxu0 0
        %1185 = vmatprep.subr.bf16.mxu0 0
        %1186 = vmatpush1.bf16.msra.mxu0 0
        %1187 = vmatprep.subr.bf16.mxu0 0
        %1188 = vmatpush1.bf16.msra.mxu0 0
        %1189 = vmatprep.subr.bf16.mxu0 0
        %1190 = vmatpush1.bf16.msra.mxu0 0
        %1191 = vmatprep.subr.bf16.mxu0 0
        %1192 = vmatpush1.bf16.msra.mxu0 0
        %1193 = vmatprep.subr.bf16.mxu0 0
        %1194 = vmatpush1.bf16.msra.mxu0 0
        %1195 = vmatprep.subr.bf16.mxu0 0
        %1196 = vmatpush1.bf16.msra.mxu0 0
        %1197 = vmatprep.subr.bf16.mxu0 0
        %1198 = vmatpush1.bf16.msra.mxu0 0
        %1199 = vmatprep.subr.bf16.mxu0 0
        %1200 = vmatpush1.bf16.msra.mxu0 0
        %1201 = vmatprep.subr.bf16.mxu0 0
        %1202 = vmatpush1.bf16.msra.mxu0 0
        %1203 = vmatprep.subr.bf16.mxu0 0
        %1204 = vmatpush1.bf16.msra.mxu0 0
        %1205 = vmatprep.subr.bf16.mxu0 0
        %1206 = vmatpush1.bf16.msra.mxu0 0
        %1207 = vmatprep.mubr.bf16.mxu0 0
        %1208 = vmatmul.mubr.bf16.gmra.mrb[0].mxu0 %v1170
        %v1209 = vpop.f32.mrb[0].mxu0
        %v1210 = vadd.f32 0.0, %v1209
        %v1211 = vpop.f32.mrb[0].mxu0
        %v1212 = vpop.f32.mrb[0].mxu0
        %v1213 = vpop.f32.mrb[0].mxu0
        %1214 = vdwg.mxu0
        %v1215 = vadd.f32 %v1052, %v1210
        %1216 = vrot.lane.b32.xlu0 %v739, 104
        %v1217 = vpop.permute.xlu0 %1216
        %1218 = vrot.lane.b32.xlu0 %v740, 104
        %v1219 = vpop.permute.xlu0 %1218
        %v1221 = vsel %vm742, %v1217, 0
        %v1224 = vsel %vm742, %v1219, 0
        %1226 = vmatprep.subr.bf16.mxu0 0
        %1227 = vmatpush1.bf16.xpose.msra.mxu0 %v1224
        %1228 = vmatprep.subr.bf16.mxu0 0
        %1229 = vmatpush1.bf16.xpose.msra.mxu0 0
        %1230 = vmatprep.subr.bf16.mxu0 0
        %1231 = vmatpush1.bf16.xpose.msra.mxu0 0
        %1232 = vmatprep.subr.bf16.mxu0 0
        %1233 = vmatpush1.bf16.xpose.msra.mxu0 0
        %1234 = vmatprep.subr.bf16.mxu0 0
        %1235 = vmatpush1.bf16.xpose.msra.mxu0 0
        %1236 = vmatprep.subr.bf16.mxu0 0
        %1237 = vmatpush1.bf16.xpose.msra.mxu0 0
        %1238 = vmatprep.subr.bf16.mxu0 0
        %1239 = vmatpush1.bf16.xpose.msra.mxu0 0
        %1240 = vmatprep.subr.bf16.mxu0 0
        %1241 = vmatpush1.bf16.xpose.msra.mxu0 0
        %1242 = vmatprep.subr.bf16.mxu0 0
        %1243 = vmatpush1.bf16.xpose.msra.mxu0 0
        %1244 = vmatprep.subr.bf16.mxu0 0
        %1245 = vmatpush1.bf16.xpose.msra.mxu0 0
        %1246 = vmatprep.subr.bf16.mxu0 0
        %1247 = vmatpush1.bf16.xpose.msra.mxu0 0
        %1248 = vmatprep.subr.bf16.mxu0 0
        %1249 = vmatpush1.bf16.xpose.msra.mxu0 0
        %1250 = vmatprep.subr.bf16.mxu0 0
        %1251 = vmatpush1.bf16.xpose.msra.mxu0 0
        %1252 = vmatprep.subr.bf16.mxu0 0
        %1253 = vmatpush1.bf16.xpose.msra.mxu0 0
        %1254 = vmatprep.subr.bf16.mxu0 0
        %1255 = vmatpush1.bf16.xpose.msra.mxu0 0
        %1256 = vmatprep.subr.bf16.mxu0 0
        %1257 = vmatpush1.bf16.xpose.msra.mxu0 0
        %1258 = vmatprep.mubr.bf16.mxu0 0
        %1259 = vmatmul.mubr.bf16.gmra.mrb[0].mxu0 %v1221
        %v1260 = vpop.f32.mrb[0].mxu0
        %v1261 = vadd.f32 0.0, %v1260
        %v1262 = vpop.f32.mrb[0].mxu0
        %v1263 = vpop.f32.mrb[0].mxu0
        %v1264 = vpop.f32.mrb[0].mxu0
        %1265 = vdwg.mxu0
        %v1266 = vsel %vm742, %v1261, -inf
        %1267 = vmax.xlane.f32.xlu0 %v1266
        %v1268 = vpop.xlane.xlu0 %1267
        %v1269 = vsub.f32 %v1261, %v1268
        %v1270 = vmul.f32 %v1269, 1.442695
        %v1271 = vpow.pop %v1270
        %v1272 = vsel %vm742, %v1271, 0.0
        %1273 = vadd.xlane.f32.xlu0 %v1272
        %v1274 = vpop.xlane.xlu0 %1273
        %v1275 = vrcp.pop %v1274
        %v1276 = vmul.f32 %v1271, %v1275
        %v1277 = vpack.c.bf16 %v1276, %v1276
        %1278 = vrot.lane.b32.xlu0 %v741, 104
        %v1279 = vpop.permute.xlu0 %1278
        %v1281 = vsel %vm742, %v1277, 0
        %v1284 = vsel %vm804, %v1279, 0
        %1286 = vmatprep.subr.bf16.mxu0 0
        %1287 = vmatpush1.bf16.msra.mxu0 %v1284
        %1288 = vmatprep.subr.bf16.mxu0 0
        %1289 = vmatpush1.bf16.msra.mxu0 0
        %1290 = vmatprep.subr.bf16.mxu0 0
        %1291 = vmatpush1.bf16.msra.mxu0 0
        %1292 = vmatprep.subr.bf16.mxu0 0
        %1293 = vmatpush1.bf16.msra.mxu0 0
        %1294 = vmatprep.subr.bf16.mxu0 0
        %1295 = vmatpush1.bf16.msra.mxu0 0
        %1296 = vmatprep.subr.bf16.mxu0 0
        %1297 = vmatpush1.bf16.msra.mxu0 0
        %1298 = vmatprep.subr.bf16.mxu0 0
        %1299 = vmatpush1.bf16.msra.mxu0 0
        %1300 = vmatprep.subr.bf16.mxu0 0
        %1301 = vmatpush1.bf16.msra.mxu0 0
        %1302 = vmatprep.subr.bf16.mxu0 0
        %1303 = vmatpush1.bf16.msra.mxu0 0
        %1304 = vmatprep.subr.bf16.mxu0 0
        %1305 = vmatpush1.bf16.msra.mxu0 0
        %1306 = vmatprep.subr.bf16.mxu0 0
        %1307 = vmatpush1.bf16.msra.mxu0 0
        %1308 = vmatprep.subr.bf16.mxu0 0
        %1309 = vmatpush1.bf16.msra.mxu0 0
        %1310 = vmatprep.subr.bf16.mxu0 0
        %1311 = vmatpush1.bf16.msra.mxu0 0
        %1312 = vmatprep.subr.bf16.mxu0 0
        %1313 = vmatpush1.bf16.msra.mxu0 0
        %1314 = vmatprep.subr.bf16.mxu0 0
        %1315 = vmatpush1.bf16.msra.mxu0 0
        %1316 = vmatprep.subr.bf16.mxu0 0
        %1317 = vmatpush1.bf16.msra.mxu0 0
        %1318 = vmatprep.mubr.bf16.mxu0 0
        %1319 = vmatmul.mubr.bf16.gmra.mrb[0].mxu0 %v1281
        %v1320 = vpop.f32.mrb[0].mxu0
        %v1321 = vadd.f32 0.0, %v1320
        %v1322 = vpop.f32.mrb[0].mxu0
        %v1323 = vpop.f32.mrb[0].mxu0
        %v1324 = vpop.f32.mrb[0].mxu0
        %1325 = vdwg.mxu0
        %v1326 = vpack.c.bf16 %v1321, %v1321
        %v1327 = vld [vmem:[%s9 + $0xc] sm:$0xf]
        %v1329 = vsel %vm742, %v1326, 0
        %v1332 = vsel %vm804, %v1327, 0
        %1334 = vmatprep.subr.bf16.mxu0 0
        %1335 = vmatpush1.bf16.msra.mxu0 %v1332
        %1336 = vmatprep.subr.bf16.mxu0 0
        %1337 = vmatpush1.bf16.msra.mxu0 0
        %1338 = vmatprep.subr.bf16.mxu0 0
        %1339 = vmatpush1.bf16.msra.mxu0 0
        %1340 = vmatprep.subr.bf16.mxu0 0
        %1341 = vmatpush1.bf16.msra.mxu0 0
        %1342 = vmatprep.subr.bf16.mxu0 0
        %1343 = vmatpush1.bf16.msra.mxu0 0
        %1344 = vmatprep.subr.bf16.mxu0 0
        %1345 = vmatpush1.bf16.msra.mxu0 0
        %1346 = vmatprep.subr.bf16.mxu0 0
        %1347 = vmatpush1.bf16.msra.mxu0 0
        %1348 = vmatprep.subr.bf16.mxu0 0
        %1349 = vmatpush1.bf16.msra.mxu0 0
        %1350 = vmatprep.subr.bf16.mxu0 0
        %1351 = vmatpush1.bf16.msra.mxu0 0
        %1352 = vmatprep.subr.bf16.mxu0 0
        %1353 = vmatpush1.bf16.msra.mxu0 0
        %1354 = vmatprep.subr.bf16.mxu0 0
        %1355 = vmatpush1.bf16.msra.mxu0 0
        %1356 = vmatprep.subr.bf16.mxu0 0
        %1357 = vmatpush1.bf16.msra.mxu0 0
        %1358 = vmatprep.subr.bf16.mxu0 0
        %1359 = vmatpush1.bf16.msra.mxu0 0
        %1360 = vmatprep.subr.bf16.mxu0 0
        %1361 = vmatpush1.bf16.msra.mxu0 0
        %1362 = vmatprep.subr.bf16.mxu0 0
        %1363 = vmatpush1.bf16.msra.mxu0 0
        %1364 = vmatprep.subr.bf16.mxu0 0
        %1365 = vmatpush1.bf16.msra.mxu0 0
        %1366 = vmatprep.mubr.bf16.mxu0 0
        %1367 = vmatmul.mubr.bf16.gmra.mrb[0].mxu0 %v1329
        %v1368 = vpop.f32.mrb[0].mxu0
        %v1369 = vadd.f32 0.0, %v1368
        %v1370 = vpop.f32.mrb[0].mxu0
        %v1371 = vpop.f32.mrb[0].mxu0
        %v1372 = vpop.f32.mrb[0].mxu0
        %1373 = vdwg.mxu0
        %v1374 = vadd.f32 %v1215, %v1369
        %v1375 = vld [vmem:[%s10] sm:$0x1]
        %v1377 = vlaneseq
        %v1378 = vshrl.u32 %v1377, 7
        %v1379 = vsub.s32 0, %v1378
        %v1380 = vrot.slane %v1375, %v1379
        %v1382 = vadd.f32 %v1374, %v1380
        %1383 = vst.msk [vmem:[%s531] sm:$0xff] %vm562, %v1382
        %s1384 = sand.u32 %s303, 1
        %s1385 = scalar_lea.sflag [#allocation4], %s1384
        %s1386 = sand.u32 %s303, 1
        %s1387 = smul.addr %s1386, 8
        %s1388 = scalar_lea.vmem [#allocation13], %s1387
        // Predicated region
        $region89: #{tpu_custom_call.1} parent=63 // pred_check
          %p1389 = pneg %p313
        $region90: #{tpu_custom_call.1} parent=63 // pred_check_branch
          %1391 = sbr.rel (%p1389) target = $region92
        $region91: #{tpu_custom_call.1} parent=63 // pred_region
          %s1393 = ssub.s32 128, 128
          %1394 = vsyncadd %s1385, %s1393
          %s1395 = sadd.s32 %s38, %s37
          %s1396 = smul.addr %s1395, 128
          %s1397 = scalar_lea.hbm %s11, %s1396
          %s1399 = sshll.u32 %s1388, 4
          %s1400 = int_to_ptr.vmem [resolvable:$true] %s1399
          %1402 = dma.vmem_to_hbm [thread:$0]  %s1400, 128, %s1397, %s1385
        $region92: #{tpu_custom_call.1} parent=63 // pred_fallthru
          _
      $region64: #{tpu_custom_call.1} parent=5 // pred_fallthru
        _
      %p1403 = scmp.le.s32.totalorder 2, %s28
      // Predicated region
      $region93: #{tpu_custom_call.1} parent=5 // pred_check
        %p1404 = pneg %p1403
      $region94: #{tpu_custom_call.1} parent=5 // pred_check_branch
        %1406 = sbr.rel (%p1404) target = $region96
      $region95: #{tpu_custom_call.1} parent=5 // pred_region
        %s1407 = ssub.s32 %s28, 2
        // Predicated region
        $region97: #{tpu_custom_call.1} parent=95 // pred_check
          %p1408 = pneg %p319
        $region98: #{tpu_custom_call.1} parent=95 // pred_check_branch
          %1410 = sbr.rel (%p1408) target = $region100
        $region99: #{tpu_custom_call.1} parent=95 // pred_region
          %s1411 = sand.u32 %s304, 1
          %s1412 = scalar_lea.sflag [#allocation4], %s1411
          %s1413 = sand.u32 %s304, 1
          %s1414 = smul.addr %s1413, 8
          %s1415 = scalar_lea.vmem [#allocation13], %s1414
          %1416 = dma.done %s1412, 128
        $region100: #{tpu_custom_call.1} parent=95 // pred_fallthru
          _
      $region96: #{tpu_custom_call.1} parent=5 // pred_fallthru
        _
    $region6: #{tpu_custom_call.1} parent=1 // loop_footer
      %s32 = sadd.s32 1, %s28
    $region7: #{tpu_custom_call.1} parent=1 // loop_footer_branch
      %27 = sbr.rel target = $region3
    $region8: #{tpu_custom_call.1} parent=1 // loop_exit
      _
    %1417 = vsyncpa [#allocation3], 1
    %s1418 = scalar_lea.sflag [#allocation3], 1
    %1419 = vsyncpa %s1418, 1
    %1420 = vsyncpa [#allocation6], 1
    %s1421 = scalar_lea.sflag [#allocation6], 1
    %1422 = vsyncpa %s1421, 1
    %1423 = vsyncpa [#allocation9], 1
    %1424 = vsyncpa [#allocation12], 1
    %1425 = vsyncpa [#allocation4], 1
    %s1426 = scalar_lea.sflag [#allocation4], 1
    %1427 = vsyncpa %s1426, 1

</llo_original>
